<compile_context>
chip_gen: v7x
topology: tpu7x:2x2x1
jax: 0.10.0
libtpu: 0.0.40
codegen_flags: <defaults>
</compile_context>

<pallas_src>
import math
import functools

import jax
import jax.numpy as jnp
from jax import lax
from jax.experimental import pallas as pl
from jax.experimental.pallas import tpu as pltpu


def _attention_layer_kernel(q_ref, k_ref, v_ref,
                            wq_ref, bq_ref,
                            wk_ref, bk_ref,
                            wv_ref, bv_ref,
                            wo_ref, bo_ref,
                            out_ref,
                            kp_ref, vp_ref, ocat_ref,
                            *, n_heads, d_keys, d_values, exp_dtype):
    """One (batch, L-tile) per grid step.

    q_ref : (TL, d_model)          k_ref/v_ref : (S, d_model)
    w{q,k,v}_ref : (d_model, H*dk) bf16    b{q,k,v}_ref : (1, H*dk) f32
    wo_ref : (H*dv, d_model) bf16          bo_ref : (1, d_model) f32
    out_ref: (TL, d_model), caller dtype
    kp_ref/vp_ref : (S, H*dk/dv) bf16 persistent scratch (projected K/V cache)
    ocat_ref      : (TL, H*dv) bf16 scratch (concatenated head outputs)
    """
    f32 = jnp.float32
    bf16 = jnp.bfloat16

    # ---- K/V projections: computed once per batch (l == 0) and cached in
    # persistent VMEM scratch.  The l axis is "arbitrary" (serial), so l == 0
    # is guaranteed to run first for every batch on its core.
    @pl.when(pl.program_id(1) == 0)
    def _():
        k = jnp.dot(k_ref[...].astype(bf16), wk_ref[...],
                    preferred_element_type=f32) + bk_ref[...]
        v = jnp.dot(v_ref[...].astype(bf16), wv_ref[...],
                    preferred_element_type=f32) + bv_ref[...]
        kp_ref[...] = k.astype(bf16)
        vp_ref[...] = v.astype(bf16)

    # ---- Q projection for this L tile.  (1/sqrt(dk) pre-folded into wq/bq.)
    q = jnp.dot(q_ref[...].astype(bf16), wq_ref[...],
                preferred_element_type=f32) + bq_ref[...]
    q = q.astype(bf16)
    kp = kp_ref[...]          # (S, H*dk) bf16
    vp = vp_ref[...]          # (S, H*dv) bf16

    # Contract the last dim of both operands -> transpose-free QK^T (no kh.T).
    nt_dims = (((1,), (1,)), ((), ()))

    # TODO(synk): for n_heads >= 8 convert to lax.fori_loop to bound live
    # ranges; per-head lane slices are not 128-aligned for small d_keys.
    for h in range(n_heads):
        qh = q[:, h * d_keys:(h + 1) * d_keys]          # (TL, dk) bf16
        kh = kp[:, h * d_keys:(h + 1) * d_keys]         # (S,  dk) bf16
        vh = vp[:, h * d_values:(h + 1) * d_values]     # (S,  dv) bf16

        # Scores in f32, max-subtracted; exp in bf16 on v6e/v7x (values are
        # <= 0 so exp is in (0,1] and bf16-safe), f32 elsewhere.
        s = lax.dot_general(qh, kh, nt_dims, preferred_element_type=f32)   # (TL,S)
        s = s - jnp.max(s, axis=-1, keepdims=True)
        p = jnp.exp(s.astype(exp_dtype))
        inv_l = pl.reciprocal(jnp.sum(p.astype(f32), axis=-1, keepdims=True),
                              approx=True)
        # Unnormalized PV matmul; normalize after on the (TL, dv) result.
        oh = jnp.dot(p.astype(bf16), vh, preferred_element_type=f32) * inv_l
        # Lane-offset write into the concat scratch -> a single full-width
        # output-projection matmul (K = H*dv) after the head loop.
        ocat_ref[:, h * d_values:(h + 1) * d_values] = oh.astype(bf16)

    out = jnp.dot(ocat_ref[...], wo_ref[...], preferred_element_type=f32) + bo_ref[...]
    out_ref[...] = out.astype(out_ref.dtype)


def _tpu_vmem_capacity_bytes():
    try:
        cap = getattr(pltpu.get_tpu_info(), "vmem_capacity_bytes", None)
        if cap:
            return int(cap)
    except Exception:  # pragma: no cover - hardware query best-effort
        pass
    return 64 << 20   # conservative: valid on v5e / v6e / v7x alike


def _exp_dtype_for_device():
    # bf16 EUP exists on v6e / v7x; keep f32 on v5e and older/unknown chips.
    try:
        kind = jax.devices()[0].device_kind.lower()
    except Exception:  # pragma: no cover
        return jnp.float32
    return jnp.bfloat16 if ("v6" in kind or "7" in kind) else jnp.float32


def _choose_l_tile(L):
    for t in (512, 256, 128):
        if L % t == 0:
            return t
    return L


def prepare_params(params, n_heads):
    """One-time host-side weight prep (call outside the hot path): fold the
    1/sqrt(d_keys) softmax scale into the Q projection, cast weights to bf16
    for the MXU and biases to f32."""
    d_keys = params["wq"].shape[1] // n_heads
    scale = 1.0 / math.sqrt(d_keys)
    f32, bf16 = jnp.float32, jnp.bfloat16
    return {
        "wq": (params["wq"].astype(f32) * scale).astype(bf16),
        "bq": params["bq"].astype(f32) * scale,
        "wk": params["wk"].astype(bf16), "bk": params["bk"].astype(f32),
        "wv": params["wv"].astype(bf16), "bv": params["bv"].astype(f32),
        "wo": params["wo"].astype(bf16), "bo": params["bo"].astype(f32),
    }


@functools.partial(jax.jit, static_argnames=("n_heads",))
def attention_layer(queries, keys, values, prepared, *, n_heads):
    """Pallas implementation of AttentionLayer.forward (attn_mask=None, tau=None,
    delta=None, output_attention=False).  `prepared` comes from prepare_params().
    Returns (out [B, L, d_model], attn=None)."""
    B, L, d_model = queries.shape
    _, S, _ = keys.shape
    wq, bq = prepared["wq"], prepared["bq"]
    wk, bk = prepared["wk"], prepared["bk"]
    wv, bv = prepared["wv"], prepared["bv"]
    wo, bo = prepared["wo"], prepared["bo"]
    H = n_heads
    d_keys = wq.shape[1] // H
    d_values = wv.shape[1] // H

    TL = _choose_l_tile(L)
    grid = (B, L // TL)
    exp_dtype = _exp_dtype_for_device()

    kernel = functools.partial(_attention_layer_kernel, n_heads=H,
                               d_keys=d_keys, d_values=d_values,
                               exp_dtype=exp_dtype)

    # --- VMEM budget (per generation): default double-buffered blocks,
    # persistent K/V/o_cat scratch, unrolled head-loop f32 temporaries, with
    # a 1.5x margin; clamped below the physical capacity minus compiler
    # headroom (so v5e/v6e can use ~112 MiB, v7x stays within ~56 MiB).
    def nb(a):
        return a.size * a.dtype.itemsize

    act_item = queries.dtype.itemsize
    w_alloc = 2 * sum(nb(a) for a in (wq, wk, wv, wo, bq, bk, bv, bo))
    io_alloc = 2 * (2 * TL + 2 * S) * d_model * act_item
    scr_alloc = (S * H * d_keys + S * H * d_values + TL * H * d_values) * 2
    tmp_alloc = ((TL * H * d_keys + S * (H * d_keys + H * d_values)) * 4
                 + H * TL * S * 4 + 2 * TL * d_model * 4)
    need = int(1.5 * (w_alloc + io_alloc + scr_alloc + tmp_alloc))
    cap = _tpu_vmem_capacity_bytes()
    headroom = (8 << 20) if cap <= (64 << 20) else (16 << 20)
    vmem_limit = max(min(max(need, 32 << 20), cap - headroom), 16 << 20)

    out = pl.pallas_call(
        kernel,
        out_shape=jax.ShapeDtypeStruct((B, L, d_model), queries.dtype),
        grid_spec=pltpu.PrefetchScalarGridSpec(
            num_scalar_prefetch=0,
            grid=grid,
            in_specs=[
                # Leading batch dim squeezed out of the kernel refs (None).
                pl.BlockSpec((None, TL, d_model), lambda b, l: (b, l, 0)),
                # K / V index only on b -> DMA'd once per batch, VMEM-resident
                # across L tiles (projection only recomputed at l == 0).
                pl.BlockSpec((None, S, d_model), lambda b, l: (b, 0, 0)),
                pl.BlockSpec((None, S, d_model), lambda b, l: (b, 0, 0)),
                # Weights / biases: constant index_map -> fetched once.
                pl.BlockSpec(wq.shape, lambda b, l: (0, 0)),
                pl.BlockSpec(bq.shape, lambda b, l: (0, 0)),
                pl.BlockSpec(wk.shape, lambda b, l: (0, 0)),
                pl.BlockSpec(bk.shape, lambda b, l: (0, 0)),
                pl.BlockSpec(wv.shape, lambda b, l: (0, 0)),
                pl.BlockSpec(bv.shape, lambda b, l: (0, 0)),
                pl.BlockSpec(wo.shape, lambda b, l: (0, 0)),
                pl.BlockSpec(bo.shape, lambda b, l: (0, 0)),
            ],
            out_specs=pl.BlockSpec((None, TL, d_model), lambda b, l: (b, l, 0)),
            scratch_shapes=[
                pltpu.VMEM((S, H * d_keys), jnp.bfloat16),     # projected K cache
                pltpu.VMEM((S, H * d_values), jnp.bfloat16),   # projected V cache
                pltpu.VMEM((TL, H * d_values), jnp.bfloat16),  # concat head outputs
            ],
        ),
        compiler_params=pltpu.CompilerParams(
            # b parallel (megacore sharding on v7x); l serial ("arbitrary") so
            # the l==0 K/V-projection-into-scratch is valid per batch per core.
            dimension_semantics=("parallel", "arbitrary"),
            vmem_limit_bytes=int(vmem_limit),
        ),
    )(queries, keys, values, wq, bq, wk, bk, wv, bv, wo, bo)
    # inner_attention returns attn=None when output_attention=False.
    return out, None


def _reference(queries, keys, values, params, n_heads):
    """Plain-JAX f32 reference mirroring the PyTorch module (FullAttention, no mask)."""
    B, L, D = queries.shape
    _, S, _ = keys.shape
    H = n_heads
    q = queries @ params["wq"] + params["bq"]
    k = keys @ params["wk"] + params["bk"]
    v = values @ params["wv"] + params["bv"]
    dk = q.shape[-1] // H
    dv = v.shape[-1] // H
    q = q.reshape(B, L, H, dk)
    k = k.reshape(B, S, H, dk)
    v = v.reshape(B, S, H, dv)
    scores = jnp.einsum("blhe,bshe->bhls", q, k) / math.sqrt(dk)
    a = jax.nn.softmax(scores, axis=-1)
    o = jnp.einsum("bhls,bshd->blhd", a, v).reshape(B, L, H * dv)
    return o @ params["wo"] + params["bo"]


def _init_params(key, d_model, n_heads):
    d_keys = d_model // n_heads
    d_values = d_model // n_heads
    ks = jax.random.split(key, 8)
    scl = 0.1
    return {
        "wq": scl * jax.random.normal(ks[0], (d_model, d_keys * n_heads), jnp.float32),
        "bq": scl * jax.random.normal(ks[1], (1, d_keys * n_heads), jnp.float32),
        "wk": scl * jax.random.normal(ks[2], (d_model, d_keys * n_heads), jnp.float32),
        "bk": scl * jax.random.normal(ks[3], (1, d_keys * n_heads), jnp.float32),
        "wv": scl * jax.random.normal(ks[4], (d_model, d_values * n_heads), jnp.float32),
        "bv": scl * jax.random.normal(ks[5], (1, d_values * n_heads), jnp.float32),
        "wo": scl * jax.random.normal(ks[6], (d_values * n_heads, d_model), jnp.float32),
        "bo": scl * jax.random.normal(ks[7], (1, d_model), jnp.float32),
    }


if __name__ == "__main__":
    B, L, S, d_model, n_heads = 2, 8, 8, 32, 4

    key = jax.random.PRNGKey(0)
    kq, kk, kv, kp = jax.random.split(key, 4)
    queries = jax.random.normal(kq, (B, L, d_model), jnp.float32)
    keys_in = jax.random.normal(kk, (B, S, d_model), jnp.float32)
    values_in = jax.random.normal(kv, (B, S, d_model), jnp.float32)
    params = _init_params(kp, d_model, n_heads)

    prepared = prepare_params(params, n_heads)   # one-time weight fold / cast
    out, attn = attention_layer(queries, keys_in, values_in, prepared, n_heads=n_heads)
    out = jax.block_until_ready(out)

    ref = _reference(queries, keys_in, values_in, params, n_heads)
    assert out.shape == (B, L, d_model)
    assert attn is None
    # bf16 MXU operands + (possibly) bf16 exp + approx reciprocal -> loose tol.
    err = float(jnp.max(jnp.abs(out.astype(jnp.float32) - ref)))
    assert err < 5e-2, f"mismatch vs reference: {err}"

    print("KERNEL_OK")
</pallas_src>

<mosaic_0001>
module attributes {stable_mosaic.version = 11 : i64} {
  func.func @_attention_layer_kernel(%arg0: i32, %arg1: i32, %arg2: memref<1x8x32xf32, #tpu.memory_space<vmem>>, %arg3: memref<1x8x32xf32, #tpu.memory_space<vmem>>, %arg4: memref<1x8x32xf32, #tpu.memory_space<vmem>>, %arg5: memref<32x32xbf16, #tpu.memory_space<vmem>>, %arg6: memref<1x32xf32, #tpu.memory_space<vmem>>, %arg7: memref<32x32xbf16, #tpu.memory_space<vmem>>, %arg8: memref<1x32xf32, #tpu.memory_space<vmem>>, %arg9: memref<32x32xbf16, #tpu.memory_space<vmem>>, %arg10: memref<1x32xf32, #tpu.memory_space<vmem>>, %arg11: memref<32x32xbf16, #tpu.memory_space<vmem>>, %arg12: memref<1x32xf32, #tpu.memory_space<vmem>>, %arg13: memref<1x8x32xf32, #tpu.memory_space<vmem>>, %arg14: memref<8x32xbf16, #tpu.memory_space<vmem>>, %arg15: memref<8x32xbf16, #tpu.memory_space<vmem>>, %arg16: memref<8x32xbf16, #tpu.memory_space<vmem>>) attributes {dimension_semantics = [#tpu.dimension_semantics<parallel>, #tpu.dimension_semantics<arbitrary>], iteration_bounds = array<i64: 2, 1>, scalar_prefetch = 0 : i64, scratch_operands = 3 : i64, tpu.core_type = #tpu.core_type<tc>, window_params = [{transform_indices = @transform_0, window_bounds = array<i64: 1, 8, 32>}, {transform_indices = @transform_1, window_bounds = array<i64: 1, 8, 32>}, {transform_indices = @transform_2, window_bounds = array<i64: 1, 8, 32>}, {pipeline_mode = #tpu.pipeline_mode<synchronous>, transform_indices = @transform_3, window_bounds = array<i64: 32, 32>}, {pipeline_mode = #tpu.pipeline_mode<synchronous>, transform_indices = @transform_4, window_bounds = array<i64: 1, 32>}, {pipeline_mode = #tpu.pipeline_mode<synchronous>, transform_indices = @transform_5, window_bounds = array<i64: 32, 32>}, {pipeline_mode = #tpu.pipeline_mode<synchronous>, transform_indices = @transform_6, window_bounds = array<i64: 1, 32>}, {pipeline_mode = #tpu.pipeline_mode<synchronous>, transform_indices = @transform_7, window_bounds = array<i64: 32, 32>}, {pipeline_mode = #tpu.pipeline_mode<synchronous>, transform_indices = @transform_8, window_bounds = array<i64: 1, 32>}, {pipeline_mode = #tpu.pipeline_mode<synchronous>, transform_indices = @transform_9, window_bounds = array<i64: 32, 32>}, {pipeline_mode = #tpu.pipeline_mode<synchronous>, transform_indices = @transform_10, window_bounds = array<i64: 1, 32>}, {transform_indices = @transform_11, window_bounds = array<i64: 1, 8, 32>}]} {
    %c0_i32 = arith.constant 0 : i32
    %0 = arith.cmpi eq, %arg1, %c0_i32 : i32
    %1 = arith.extui %0 : i1 to i32
    %c0_i32_0 = arith.constant 0 : i32
    %2 = arith.cmpi ne, %1, %c0_i32_0 : i32
    scf.if %2 {
      %c0_42 = arith.constant 0 : index
      %c0_43 = arith.constant 0 : index
      %c0_44 = arith.constant 0 : index
      %95 = vector.load %arg3[%c0_42, %c0_43, %c0_44] : memref<1x8x32xf32, #tpu.memory_space<vmem>>, vector<1x8x32xf32>
      %96 = vector.shape_cast %95 : vector<1x8x32xf32> to vector<8x32xf32>
      %97 = arith.truncf %96 : vector<8x32xf32> to vector<8x32xbf16>
      %c0_45 = arith.constant 0 : index
      %c0_46 = arith.constant 0 : index
      %98 = vector.load %arg7[%c0_45, %c0_46] : memref<32x32xbf16, #tpu.memory_space<vmem>>, vector<32x32xbf16>
      %cst_47 = arith.constant dense<0.000000e+00> : vector<8x32xf32>
      %99 = tpu.matmul %97, %98, %cst_47 {dimension_numbers = #tpu.dot_dimension_numbers<[1], [0], [0], [1], [0, 0, 1, 1], [], []>} : vector<8x32xbf16>, vector<32x32xbf16>, vector<8x32xf32> -> vector<8x32xf32>
      %c0_48 = arith.constant 0 : index
      %c0_49 = arith.constant 0 : index
      %100 = vector.load %arg8[%c0_48, %c0_49] : memref<1x32xf32, #tpu.memory_space<vmem>>, vector<1x32xf32>
      %101 = vector.broadcast %100 : vector<1x32xf32> to vector<8x32xf32>
      %102 = arith.addf %99, %101 : vector<8x32xf32>
      %c0_50 = arith.constant 0 : index
      %c0_51 = arith.constant 0 : index
      %c0_52 = arith.constant 0 : index
      %103 = vector.load %arg4[%c0_50, %c0_51, %c0_52] : memref<1x8x32xf32, #tpu.memory_space<vmem>>, vector<1x8x32xf32>
      %104 = vector.shape_cast %103 : vector<1x8x32xf32> to vector<8x32xf32>
      %105 = arith.truncf %104 : vector<8x32xf32> to vector<8x32xbf16>
      %c0_53 = arith.constant 0 : index
      %c0_54 = arith.constant 0 : index
      %106 = vector.load %arg9[%c0_53, %c0_54] : memref<32x32xbf16, #tpu.memory_space<vmem>>, vector<32x32xbf16>
      %cst_55 = arith.constant dense<0.000000e+00> : vector<8x32xf32>
      %107 = tpu.matmul %105, %106, %cst_55 {dimension_numbers = #tpu.dot_dimension_numbers<[1], [0], [0], [1], [0, 0, 1, 1], [], []>} : vector<8x32xbf16>, vector<32x32xbf16>, vector<8x32xf32> -> vector<8x32xf32>
      %c0_56 = arith.constant 0 : index
      %c0_57 = arith.constant 0 : index
      %108 = vector.load %arg10[%c0_56, %c0_57] : memref<1x32xf32, #tpu.memory_space<vmem>>, vector<1x32xf32>
      %109 = vector.broadcast %108 : vector<1x32xf32> to vector<8x32xf32>
      %110 = arith.addf %107, %109 : vector<8x32xf32>
      %111 = arith.truncf %102 : vector<8x32xf32> to vector<8x32xbf16>
      %c0_58 = arith.constant 0 : index
      %c0_59 = arith.constant 0 : index
      %112 = vector.load %arg14[%c0_58, %c0_59] : memref<8x32xbf16, #tpu.memory_space<vmem>>, vector<8x32xbf16>
      tpu.vector_store %arg14[%c0_58, %c0_59], %111 {strides = array<i32>} : memref<8x32xbf16, #tpu.memory_space<vmem>>, vector<8x32xbf16>,
      %113 = arith.truncf %110 : vector<8x32xf32> to vector<8x32xbf16>
      %c0_60 = arith.constant 0 : index
      %c0_61 = arith.constant 0 : index
      %114 = vector.load %arg15[%c0_60, %c0_61] : memref<8x32xbf16, #tpu.memory_space<vmem>>, vector<8x32xbf16>
      tpu.vector_store %arg15[%c0_60, %c0_61], %113 {strides = array<i32>} : memref<8x32xbf16, #tpu.memory_space<vmem>>, vector<8x32xbf16>,
    } else {
    }
    %c0 = arith.constant 0 : index
    %c0_1 = arith.constant 0 : index
    %c0_2 = arith.constant 0 : index
    %3 = vector.load %arg2[%c0, %c0_1, %c0_2] : memref<1x8x32xf32, #tpu.memory_space<vmem>>, vector<1x8x32xf32>
    %4 = vector.shape_cast %3 : vector<1x8x32xf32> to vector<8x32xf32>
    %5 = arith.truncf %4 : vector<8x32xf32> to vector<8x32xbf16>
    %c0_3 = arith.constant 0 : index
    %c0_4 = arith.constant 0 : index
    %6 = vector.load %arg5[%c0_3, %c0_4] : memref<32x32xbf16, #tpu.memory_space<vmem>>, vector<32x32xbf16>
    %cst = arith.constant dense<0.000000e+00> : vector<8x32xf32>
    %7 = tpu.matmul %5, %6, %cst {dimension_numbers = #tpu.dot_dimension_numbers<[1], [0], [0], [1], [0, 0, 1, 1], [], []>} : vector<8x32xbf16>, vector<32x32xbf16>, vector<8x32xf32> -> vector<8x32xf32>
    %c0_5 = arith.constant 0 : index
    %c0_6 = arith.constant 0 : index
    %8 = vector.load %arg6[%c0_5, %c0_6] : memref<1x32xf32, #tpu.memory_space<vmem>>, vector<1x32xf32>
    %9 = vector.broadcast %8 : vector<1x32xf32> to vector<8x32xf32>
    %10 = arith.addf %7, %9 : vector<8x32xf32>
    %11 = arith.truncf %10 : vector<8x32xf32> to vector<8x32xbf16>
    %c0_7 = arith.constant 0 : index
    %c0_8 = arith.constant 0 : index
    %12 = vector.load %arg14[%c0_7, %c0_8] : memref<8x32xbf16, #tpu.memory_space<vmem>>, vector<8x32xbf16>
    %c0_9 = arith.constant 0 : index
    %c0_10 = arith.constant 0 : index
    %13 = vector.load %arg15[%c0_9, %c0_10] : memref<8x32xbf16, #tpu.memory_space<vmem>>, vector<8x32xbf16>
    %14 = vector.extract_strided_slice %11 {offsets = [0, 0], sizes = [8, 8], strides = [1, 1]} : vector<8x32xbf16> to vector<8x8xbf16>
    %15 = vector.extract_strided_slice %12 {offsets = [0, 0], sizes = [8, 8], strides = [1, 1]} : vector<8x32xbf16> to vector<8x8xbf16>
    %16 = vector.extract_strided_slice %13 {offsets = [0, 0], sizes = [8, 8], strides = [1, 1]} : vector<8x32xbf16> to vector<8x8xbf16>
    %cst_11 = arith.constant dense<0.000000e+00> : vector<8x8xf32>
    %17 = tpu.matmul %14, %15, %cst_11 {dimension_numbers = #tpu.dot_dimension_numbers<[1], [1], [0], [0], [0, 0, 1, 0], [], []>} : vector<8x8xbf16>, vector<8x8xbf16>, vector<8x8xf32> -> vector<8x8xf32>
    %cst_12 = arith.constant dense<0xFF800000> : vector<8xf32>
    %18 = vector.multi_reduction <maximumf>, %17, %cst_12 [1] : vector<8x8xf32> to vector<8xf32>
    %19 = vector.shape_cast %18 : vector<8xf32> to vector<8x1xf32>
    %20 = vector.broadcast %19 : vector<8x1xf32> to vector<8x8xf32>
    %21 = arith.subf %17, %20 : vector<8x8xf32>
    %22 = math.exp %21 : vector<8x8xf32>
    %cst_13 = arith.constant dense<0.000000e+00> : vector<8xf32>
    %23 = vector.multi_reduction <add>, %22, %cst_13 [1] : vector<8x8xf32> to vector<8xf32>
    %24 = vector.shape_cast %23 : vector<8xf32> to vector<8x1xf32>
    %25 = tpu.reciprocal %24 {approx = true} : vector<8x1xf32> -> vector<8x1xf32>
    %26 = arith.truncf %22 : vector<8x8xf32> to vector<8x8xbf16>
    %cst_14 = arith.constant dense<0.000000e+00> : vector<8x8xf32>
    %27 = tpu.matmul %26, %16, %cst_14 {dimension_numbers = #tpu.dot_dimension_numbers<[1], [0], [0], [1], [0, 0, 1, 1], [], []>} : vector<8x8xbf16>, vector<8x8xbf16>, vector<8x8xf32> -> vector<8x8xf32>
    %28 = vector.broadcast %25 : vector<8x1xf32> to vector<8x8xf32>
    %29 = arith.mulf %27, %28 : vector<8x8xf32>
    %30 = arith.truncf %29 : vector<8x8xf32> to vector<8x8xbf16>
    %c0_15 = arith.constant 0 : index
    %c0_16 = arith.constant 0 : index
    %31 = vector.load %arg16[%c0_15, %c0_16] : memref<8x32xbf16, #tpu.memory_space<vmem>>, vector<8x8xbf16>
    tpu.vector_store %arg16[%c0_15, %c0_16], %30 {strides = array<i32>} : memref<8x32xbf16, #tpu.memory_space<vmem>>, vector<8x8xbf16>,
    %32 = vector.extract_strided_slice %11 {offsets = [0, 8], sizes = [8, 8], strides = [1, 1]} : vector<8x32xbf16> to vector<8x8xbf16>
    %33 = vector.extract_strided_slice %12 {offsets = [0, 8], sizes = [8, 8], strides = [1, 1]} : vector<8x32xbf16> to vector<8x8xbf16>
    %34 = vector.extract_strided_slice %13 {offsets = [0, 8], sizes = [8, 8], strides = [1, 1]} : vector<8x32xbf16> to vector<8x8xbf16>
    %cst_17 = arith.constant dense<0.000000e+00> : vector<8x8xf32>
    %35 = tpu.matmul %32, %33, %cst_17 {dimension_numbers = #tpu.dot_dimension_numbers<[1], [1], [0], [0], [0, 0, 1, 0], [], []>} : vector<8x8xbf16>, vector<8x8xbf16>, vector<8x8xf32> -> vector<8x8xf32>
    %cst_18 = arith.constant dense<0xFF800000> : vector<8xf32>
    %36 = vector.multi_reduction <maximumf>, %35, %cst_18 [1] : vector<8x8xf32> to vector<8xf32>
    %37 = vector.shape_cast %36 : vector<8xf32> to vector<8x1xf32>
    %38 = vector.broadcast %37 : vector<8x1xf32> to vector<8x8xf32>
    %39 = arith.subf %35, %38 : vector<8x8xf32>
    %40 = math.exp %39 : vector<8x8xf32>
    %cst_19 = arith.constant dense<0.000000e+00> : vector<8xf32>
    %41 = vector.multi_reduction <add>, %40, %cst_19 [1] : vector<8x8xf32> to vector<8xf32>
    %42 = vector.shape_cast %41 : vector<8xf32> to vector<8x1xf32>
    %43 = tpu.reciprocal %42 {approx = true} : vector<8x1xf32> -> vector<8x1xf32>
    %44 = arith.truncf %40 : vector<8x8xf32> to vector<8x8xbf16>
    %cst_20 = arith.constant dense<0.000000e+00> : vector<8x8xf32>
    %45 = tpu.matmul %44, %34, %cst_20 {dimension_numbers = #tpu.dot_dimension_numbers<[1], [0], [0], [1], [0, 0, 1, 1], [], []>} : vector<8x8xbf16>, vector<8x8xbf16>, vector<8x8xf32> -> vector<8x8xf32>
    %46 = vector.broadcast %43 : vector<8x1xf32> to vector<8x8xf32>
    %47 = arith.mulf %45, %46 : vector<8x8xf32>
    %48 = arith.truncf %47 : vector<8x8xf32> to vector<8x8xbf16>
    %c0_21 = arith.constant 0 : index
    %c8 = arith.constant 8 : index
    %49 = vector.load %arg16[%c0_21, %c8] : memref<8x32xbf16, #tpu.memory_space<vmem>>, vector<8x8xbf16>
    tpu.vector_store %arg16[%c0_21, %c8], %48 {strides = array<i32>} : memref<8x32xbf16, #tpu.memory_space<vmem>>, vector<8x8xbf16>,
    %50 = vector.extract_strided_slice %11 {offsets = [0, 16], sizes = [8, 8], strides = [1, 1]} : vector<8x32xbf16> to vector<8x8xbf16>
    %51 = vector.extract_strided_slice %12 {offsets = [0, 16], sizes = [8, 8], strides = [1, 1]} : vector<8x32xbf16> to vector<8x8xbf16>
    %52 = vector.extract_strided_slice %13 {offsets = [0, 16], sizes = [8, 8], strides = [1, 1]} : vector<8x32xbf16> to vector<8x8xbf16>
    %cst_22 = arith.constant dense<0.000000e+00> : vector<8x8xf32>
    %53 = tpu.matmul %50, %51, %cst_22 {dimension_numbers = #tpu.dot_dimension_numbers<[1], [1], [0], [0], [0, 0, 1, 0], [], []>} : vector<8x8xbf16>, vector<8x8xbf16>, vector<8x8xf32> -> vector<8x8xf32>
    %cst_23 = arith.constant dense<0xFF800000> : vector<8xf32>
    %54 = vector.multi_reduction <maximumf>, %53, %cst_23 [1] : vector<8x8xf32> to vector<8xf32>
    %55 = vector.shape_cast %54 : vector<8xf32> to vector<8x1xf32>
    %56 = vector.broadcast %55 : vector<8x1xf32> to vector<8x8xf32>
    %57 = arith.subf %53, %56 : vector<8x8xf32>
    %58 = math.exp %57 : vector<8x8xf32>
    %cst_24 = arith.constant dense<0.000000e+00> : vector<8xf32>
    %59 = vector.multi_reduction <add>, %58, %cst_24 [1] : vector<8x8xf32> to vector<8xf32>
    %60 = vector.shape_cast %59 : vector<8xf32> to vector<8x1xf32>
    %61 = tpu.reciprocal %60 {approx = true} : vector<8x1xf32> -> vector<8x1xf32>
    %62 = arith.truncf %58 : vector<8x8xf32> to vector<8x8xbf16>
    %cst_25 = arith.constant dense<0.000000e+00> : vector<8x8xf32>
    %63 = tpu.matmul %62, %52, %cst_25 {dimension_numbers = #tpu.dot_dimension_numbers<[1], [0], [0], [1], [0, 0, 1, 1], [], []>} : vector<8x8xbf16>, vector<8x8xbf16>, vector<8x8xf32> -> vector<8x8xf32>
    %64 = vector.broadcast %61 : vector<8x1xf32> to vector<8x8xf32>
    %65 = arith.mulf %63, %64 : vector<8x8xf32>
    %66 = arith.truncf %65 : vector<8x8xf32> to vector<8x8xbf16>
    %c0_26 = arith.constant 0 : index
    %c16 = arith.constant 16 : index
    %67 = vector.load %arg16[%c0_26, %c16] : memref<8x32xbf16, #tpu.memory_space<vmem>>, vector<8x8xbf16>
    tpu.vector_store %arg16[%c0_26, %c16], %66 {strides = array<i32>} : memref<8x32xbf16, #tpu.memory_space<vmem>>, vector<8x8xbf16>,
    %68 = vector.extract_strided_slice %11 {offsets = [0, 24], sizes = [8, 8], strides = [1, 1]} : vector<8x32xbf16> to vector<8x8xbf16>
    %69 = vector.extract_strided_slice %12 {offsets = [0, 24], sizes = [8, 8], strides = [1, 1]} : vector<8x32xbf16> to vector<8x8xbf16>
    %70 = vector.extract_strided_slice %13 {offsets = [0, 24], sizes = [8, 8], strides = [1, 1]} : vector<8x32xbf16> to vector<8x8xbf16>
    %cst_27 = arith.constant dense<0.000000e+00> : vector<8x8xf32>
    %71 = tpu.matmul %68, %69, %cst_27 {dimension_numbers = #tpu.dot_dimension_numbers<[1], [1], [0], [0], [0, 0, 1, 0], [], []>} : vector<8x8xbf16>, vector<8x8xbf16>, vector<8x8xf32> -> vector<8x8xf32>
    %cst_28 = arith.constant dense<0xFF800000> : vector<8xf32>
    %72 = vector.multi_reduction <maximumf>, %71, %cst_28 [1] : vector<8x8xf32> to vector<8xf32>
    %73 = vector.shape_cast %72 : vector<8xf32> to vector<8x1xf32>
    %74 = vector.broadcast %73 : vector<8x1xf32> to vector<8x8xf32>
    %75 = arith.subf %71, %74 : vector<8x8xf32>
    %76 = math.exp %75 : vector<8x8xf32>
    %cst_29 = arith.constant dense<0.000000e+00> : vector<8xf32>
    %77 = vector.multi_reduction <add>, %76, %cst_29 [1] : vector<8x8xf32> to vector<8xf32>
    %78 = vector.shape_cast %77 : vector<8xf32> to vector<8x1xf32>
    %79 = tpu.reciprocal %78 {approx = true} : vector<8x1xf32> -> vector<8x1xf32>
    %80 = arith.truncf %76 : vector<8x8xf32> to vector<8x8xbf16>
    %cst_30 = arith.constant dense<0.000000e+00> : vector<8x8xf32>
    %81 = tpu.matmul %80, %70, %cst_30 {dimension_numbers = #tpu.dot_dimension_numbers<[1], [0], [0], [1], [0, 0, 1, 1], [], []>} : vector<8x8xbf16>, vector<8x8xbf16>, vector<8x8xf32> -> vector<8x8xf32>
    %82 = vector.broadcast %79 : vector<8x1xf32> to vector<8x8xf32>
    %83 = arith.mulf %81, %82 : vector<8x8xf32>
    %84 = arith.truncf %83 : vector<8x8xf32> to vector<8x8xbf16>
    %c0_31 = arith.constant 0 : index
    %c24 = arith.constant 24 : index
    %85 = vector.load %arg16[%c0_31, %c24] : memref<8x32xbf16, #tpu.memory_space<vmem>>, vector<8x8xbf16>
    tpu.vector_store %arg16[%c0_31, %c24], %84 {strides = array<i32>} : memref<8x32xbf16, #tpu.memory_space<vmem>>, vector<8x8xbf16>,
    %c0_32 = arith.constant 0 : index
    %c0_33 = arith.constant 0 : index
    %86 = vector.load %arg16[%c0_32, %c0_33] : memref<8x32xbf16, #tpu.memory_space<vmem>>, vector<8x32xbf16>
    %c0_34 = arith.constant 0 : index
    %c0_35 = arith.constant 0 : index
    %87 = vector.load %arg11[%c0_34, %c0_35] : memref<32x32xbf16, #tpu.memory_space<vmem>>, vector<32x32xbf16>
    %cst_36 = arith.constant dense<0.000000e+00> : vector<8x32xf32>
    %88 = tpu.matmul %86, %87, %cst_36 {dimension_numbers = #tpu.dot_dimension_numbers<[1], [0], [0], [1], [0, 0, 1, 1], [], []>} : vector<8x32xbf16>, vector<32x32xbf16>, vector<8x32xf32> -> vector<8x32xf32>
    %c0_37 = arith.constant 0 : index
    %c0_38 = arith.constant 0 : index
    %89 = vector.load %arg12[%c0_37, %c0_38] : memref<1x32xf32, #tpu.memory_space<vmem>>, vector<1x32xf32>
    %90 = vector.broadcast %89 : vector<1x32xf32> to vector<8x32xf32>
    %91 = arith.addf %88, %90 : vector<8x32xf32>
    %c0_39 = arith.constant 0 : index
    %c0_40 = arith.constant 0 : index
    %c0_41 = arith.constant 0 : index
    %92 = vector.load %arg13[%c0_39, %c0_40, %c0_41] : memref<1x8x32xf32, #tpu.memory_space<vmem>>, vector<1x8x32xf32>
    %93 = vector.shape_cast %92 : vector<1x8x32xf32> to vector<8x32xf32>
    %94 = vector.shape_cast %91 : vector<8x32xf32> to vector<1x8x32xf32>
    tpu.vector_store %arg13[%c0_39, %c0_40, %c0_41], %94 {strides = array<i32>} : memref<1x8x32xf32, #tpu.memory_space<vmem>>, vector<1x8x32xf32>,
    return
  }
  func.func @transform_0(%arg0: i32, %arg1: i32) -> (i32, i32, i32) {
    %c0_i32 = arith.constant 0 : i32
    %c0_i32_0 = arith.constant 0 : i32
    return %arg0, %arg1, %c0_i32 : i32, i32, i32
  }
  func.func @transform_1(%arg0: i32, %arg1: i32) -> (i32, i32, i32) {
    %c0_i32 = arith.constant 0 : i32
    %c0_i32_0 = arith.constant 0 : i32
    %c0_i32_1 = arith.constant 0 : i32
    return %arg0, %c0_i32, %c0_i32_0 : i32, i32, i32
  }
  func.func @transform_2(%arg0: i32, %arg1: i32) -> (i32, i32, i32) {
    %c0_i32 = arith.constant 0 : i32
    %c0_i32_0 = arith.constant 0 : i32
    %c0_i32_1 = arith.constant 0 : i32
    return %arg0, %c0_i32, %c0_i32_0 : i32, i32, i32
  }
  func.func @transform_3(%arg0: i32, %arg1: i32) -> (i32, i32) {
    %c0_i32 = arith.constant 0 : i32
    %c0_i32_0 = arith.constant 0 : i32
    %c0_i32_1 = arith.constant 0 : i32
    return %c0_i32, %c0_i32_0 : i32, i32
  }
  func.func @transform_4(%arg0: i32, %arg1: i32) -> (i32, i32) {
    %c0_i32 = arith.constant 0 : i32
    %c0_i32_0 = arith.constant 0 : i32
    %c0_i32_1 = arith.constant 0 : i32
    return %c0_i32, %c0_i32_0 : i32, i32
  }
  func.func @transform_5(%arg0: i32, %arg1: i32) -> (i32, i32) {
    %c0_i32 = arith.constant 0 : i32
    %c0_i32_0 = arith.constant 0 : i32
    %c0_i32_1 = arith.constant 0 : i32
    return %c0_i32, %c0_i32_0 : i32, i32
  }
  func.func @transform_6(%arg0: i32, %arg1: i32) -> (i32, i32) {
    %c0_i32 = arith.constant 0 : i32
    %c0_i32_0 = arith.constant 0 : i32
    %c0_i32_1 = arith.constant 0 : i32
    return %c0_i32, %c0_i32_0 : i32, i32
  }
  func.func @transform_7(%arg0: i32, %arg1: i32) -> (i32, i32) {
    %c0_i32 = arith.constant 0 : i32
    %c0_i32_0 = arith.constant 0 : i32
    %c0_i32_1 = arith.constant 0 : i32
    return %c0_i32, %c0_i32_0 : i32, i32
  }
  func.func @transform_8(%arg0: i32, %arg1: i32) -> (i32, i32) {
    %c0_i32 = arith.constant 0 : i32
    %c0_i32_0 = arith.constant 0 : i32
    %c0_i32_1 = arith.constant 0 : i32
    return %c0_i32, %c0_i32_0 : i32, i32
  }
  func.func @transform_9(%arg0: i32, %arg1: i32) -> (i32, i32) {
    %c0_i32 = arith.constant 0 : i32
    %c0_i32_0 = arith.constant 0 : i32
    %c0_i32_1 = arith.constant 0 : i32
    return %c0_i32, %c0_i32_0 : i32, i32
  }
  func.func @transform_10(%arg0: i32, %arg1: i32) -> (i32, i32) {
    %c0_i32 = arith.constant 0 : i32
    %c0_i32_0 = arith.constant 0 : i32
    %c0_i32_1 = arith.constant 0 : i32
    return %c0_i32, %c0_i32_0 : i32, i32
  }
  func.func @transform_11(%arg0: i32, %arg1: i32) -> (i32, i32, i32) {
    %c0_i32 = arith.constant 0 : i32
    %c0_i32_0 = arith.constant 0 : i32
    return %arg0, %arg1, %c0_i32 : i32, i32, i32
  }
}

</mosaic_0001>

<llo_original>
// kernel: attention_layer.1
$region0: #{attention_layer.1}
  #allocation0 [shape = 'u32[]', space=smem, size = 0x4, offset = 0x4, fixed_abs, tag = 'smem constant byte address 0x4 - core index']
  #allocation1 [shape = 'u32[144,128]{1,0:T(1,128)}', space=vmem, size = 0x12000, scoped, tag = 'internal scratch']
  #allocation2 [shape = 'bf16[8,32]{1,0:T(8,128)(2,1)}', space=vmem, size = 0x800, scoped, tag = 'scratch operand']
  #allocation3 [shape = 'bf16[8,32]{1,0:T(8,128)(2,1)}', space=vmem, size = 0x800, scoped, tag = 'scratch operand']
  #allocation4 [shape = 'bf16[8,32]{1,0:T(8,128)(2,1)}', space=vmem, size = 0x800, scoped, tag = 'scratch operand']
  %s0 = inlined_call_operand.hbm [shape: f32[2,8,32], index: 0, kind: input, shape index: {}]
  %s1 = inlined_call_operand.hbm [shape: f32[2,8,32], index: 1, kind: input, shape index: {}]
  %s2 = inlined_call_operand.hbm [shape: f32[2,8,32], index: 2, kind: input, shape index: {}]
  %s3 = inlined_call_operand.vmem [shape: bf16[32,32], index: 3, kind: input, shape index: {}]
  %s4 = inlined_call_operand.vmem [shape: f32[1,32], index: 4, kind: input, shape index: {}]
  %s5 = inlined_call_operand.hbm [shape: bf16[32,32], index: 5, kind: input, shape index: {}]
  %s6 = inlined_call_operand.vmem [shape: f32[1,32], index: 6, kind: input, shape index: {}]
  %s7 = inlined_call_operand.vmem [shape: bf16[32,32], index: 7, kind: input, shape index: {}]
  %s8 = inlined_call_operand.hbm [shape: f32[1,32], index: 8, kind: input, shape index: {}]
  %s9 = inlined_call_operand.hbm [shape: bf16[32,32], index: 9, kind: input, shape index: {}]
  %s10 = inlined_call_operand.hbm [shape: f32[1,32], index: 10, kind: input, shape index: {}]
  %s11 = inlined_call_operand.hbm [shape: f32[2,8,32], index: 11, kind: output, shape index: {}]
  %s12 = sld [smem:[#allocation0]]
  $region109: #{attention_layer.1} parent=0
    _
  %s14 = ssub.s32 1, %s12
  %s15 = scalar_select 0, %s14, %s12
  $region1: #{attention_layer.1} parent=0
    #allocation5 [shape = 'u8[8192]{0}', space=vmem, size = 0x2000, scoped, tag = 'input window, operand 0']
    #allocation6 [shape = 's32[2]{0}', space=sflag, size = 0x8, scoped, tag = 'scoped memory for attention_layer.1']
    #allocation7 [shape = 's32[2]{0}', space=sflag, size = 0x8, scoped, tag = 'scoped memory for attention_layer.1']
    #allocation8 [shape = 'u8[8192]{0}', space=vmem, size = 0x2000, scoped, tag = 'input window, operand 1']
    #allocation9 [shape = 's32[2]{0}', space=sflag, size = 0x8, scoped, tag = 'scoped memory for attention_layer.1']
    #allocation10 [shape = 'u8[8192]{0}', space=vmem, size = 0x2000, scoped, tag = 'input window, operand 2']
    #allocation11 [shape = 'u8[8192]{0}', space=vmem, size = 0x2000, scoped, tag = 'input window, operand 5, single buffered']
    #allocation12 [shape = 's32[1]{0}', space=sflag, size = 0x4, scoped, tag = 'scoped memory for attention_layer.1']
    #allocation13 [shape = 'u8[512]{0}', space=vmem, size = 0x400, scoped, tag = 'input window, operand 8, single buffered']
    #allocation14 [shape = 'u8[8192]{0}', space=vmem, size = 0x2000, scoped, tag = 'input window, operand 9, single buffered']
    #allocation15 [shape = 's32[1]{0}', space=sflag, size = 0x4, scoped, tag = 'scoped memory for attention_layer.1']
    #allocation16 [shape = 'u8[512]{0}', space=vmem, size = 0x400, scoped, tag = 'input window, operand 10, single buffered']
    #allocation17 [shape = 'u8[8192]{0}', space=vmem, size = 0x2000, scoped, tag = 'output window, operand 0']
    %16 = vsyncpa [#allocation6], 0
    %s17 = scalar_lea.sflag [#allocation6], 1
    %18 = vsyncpa %s17, 0
    %19 = vsyncpa [#allocation9], 0
    %s20 = scalar_lea.sflag [#allocation9], 1
    %21 = vsyncpa %s20, 0
    %22 = vsyncpa [#allocation12], 0
    %23 = vsyncpa [#allocation15], 0
    %24 = vsyncpa [#allocation7], 0
    %s25 = scalar_lea.sflag [#allocation7], 1
    %26 = vsyncpa %s25, 0
    loop: start=0, step=1, limit=4
    $region2: #{attention_layer.1} parent=1 // loop_pre_header
      _
    $region3: #{attention_layer.1} parent=1 // loop_header
      %s28 = sphi 0, %s32
      %p29 = scmp.ge.s32.totalorder %s28, 4
      %s35 = sphi 0, %s47
      %s36 = sphi 0, %s43
      %s37 = sphi 0, %s35
      %s38 = sphi 0, %s36
      %s39 = sphi 0, %s37
      %s40 = sphi 0, %s38
      %s52 = sphi 0, %s54
      %s55 = sphi 0, %s52
      %s56 = sphi 0, %s55
      %s72 = sphi 0, %s56
      %s78 = sphi 0, %s80
      %s81 = sphi 0, %s78
      %s82 = sphi 0, %s81
      %s98 = sphi 0, %s82
      %s104 = sphi 0, %s106
      %s107 = sphi 0, %s104
      %s108 = sphi 0, %s107
      %s124 = sphi 0, %s108
      %s128 = sphi 0, %s128
      %s130 = sphi 0, %s128
      %s131 = sphi 0, %s130
      %s145 = sphi 0, %s131
      %s149 = sphi 0, %s149
      %s151 = sphi 0, %s149
      %s152 = sphi 0, %s151
      %s166 = sphi 0, %s152
      %s170 = sphi 0, %s170
      %s172 = sphi 0, %s170
      %s173 = sphi 0, %s172
      %s187 = sphi 0, %s173
      %s191 = sphi 0, %s191
      %s193 = sphi 0, %s191
      %s194 = sphi 0, %s193
      %s208 = sphi 0, %s194
      %s212 = sphi 0, %s212
      %s214 = sphi 0, %s212
      %s215 = sphi 0, %s214
      %s229 = sphi 0, %s215
      %s233 = sphi 0, %s233
      %s235 = sphi 0, %s233
      %s236 = sphi 0, %s235
      %s250 = sphi 0, %s236
      %s254 = sphi 0, %s254
      %s256 = sphi 0, %s254
      %s257 = sphi 0, %s256
      %s271 = sphi 0, %s257
      %s275 = sphi 0, %s275
      %s277 = sphi 0, %s275
      %s278 = sphi 0, %s277
      %s292 = sphi 0, %s278
      %s300 = sphi 0, %s302
      %s303 = sphi 0, %s300
      %s304 = sphi 0, %s303
      %s320 = sphi 0, %s304
    $region4: #{attention_layer.1} parent=1 // loop_header_branch
      %31 = sbr.rel (%p29) target = $region8
    $region5: #{attention_layer.1} parent=1 // loop_body
      %s33 = ssub.s32 %s28, 1
      %s34 = ssub.s32 %s28, 2
      %s41 = sadd.s32 1, %s36
      %p42 = scmp.ge.s32.totalorder %s41, 1
      %s43 = scalar_select %p42, 0, %s41
      %s44 = sadd.s32 1, %s35
      %s45 = scalar_select %p42, %s44, %s35
      %p46 = scmp.ge.s32.totalorder %s45, 2
      %s47 = scalar_select %p46, 0, %s45
      %s48 = ssub.s32 %s35, %s47
      %s49 = ssub.s32 %s36, %s43
      %s50 = sor.u32 %s48, %s49
      %p51 = scmp.eq.s32.totalorder %s50, 0
      %s53 = sadd.s32 %s52, 1
      %s54 = scalar_select %p51, %s52, %s53
      %p57 = pneg %p51
      %p58 = scmp.eq.s32.totalorder %s28, 1
      %p59 = por %p57, %p58
      %p60 = scmp.ne.s32.totalorder %s52, %s55
      %p61 = scmp.eq.s32.totalorder %s28, 0
      %p62 = por %p60, %p61
      %p63 = scmp.ne.s32.totalorder %s52, %s55
      %p64 = scmp.eq.s32.totalorder %s33, 1
      %p65 = por %p63, %p64
      %p66 = scmp.ne.s32.totalorder %s55, %s56
      %p67 = scmp.eq.s32.totalorder %s33, 0
      %p68 = por %p66, %p67
      %p69 = scmp.ne.s32.totalorder %s55, %s56
      %p70 = scmp.eq.s32.totalorder %s34, 1
      %p71 = por %p69, %p70
      %p73 = scmp.ne.s32.totalorder %s56, %s72
      %p74 = scmp.eq.s32.totalorder %s34, 0
      %p75 = por %p73, %p74
      %s76 = ssub.s32 %s35, %s47
      %p77 = scmp.eq.s32.totalorder %s76, 0
      %s79 = sadd.s32 %s78, 1
      %s80 = scalar_select %p77, %s78, %s79
      %p83 = pneg %p77
      %p84 = scmp.eq.s32.totalorder %s28, 1
      %p85 = por %p83, %p84
      %p86 = scmp.ne.s32.totalorder %s78, %s81
      %p87 = scmp.eq.s32.totalorder %s28, 0
      %p88 = por %p86, %p87
      %p89 = scmp.ne.s32.totalorder %s78, %s81
      %p90 = scmp.eq.s32.totalorder %s33, 1
      %p91 = por %p89, %p90
      %p92 = scmp.ne.s32.totalorder %s81, %s82
      %p93 = scmp.eq.s32.totalorder %s33, 0
      %p94 = por %p92, %p93
      %p95 = scmp.ne.s32.totalorder %s81, %s82
      %p96 = scmp.eq.s32.totalorder %s34, 1
      %p97 = por %p95, %p96
      %p99 = scmp.ne.s32.totalorder %s82, %s98
      %p100 = scmp.eq.s32.totalorder %s34, 0
      %p101 = por %p99, %p100
      %s102 = ssub.s32 %s35, %s47
      %p103 = scmp.eq.s32.totalorder %s102, 0
      %s105 = sadd.s32 %s104, 1
      %s106 = scalar_select %p103, %s104, %s105
      %p109 = pneg %p103
      %p110 = scmp.eq.s32.totalorder %s28, 1
      %p111 = por %p109, %p110
      %p112 = scmp.ne.s32.totalorder %s104, %s107
      %p113 = scmp.eq.s32.totalorder %s28, 0
      %p114 = por %p112, %p113
      %p115 = scmp.ne.s32.totalorder %s104, %s107
      %p116 = scmp.eq.s32.totalorder %s33, 1
      %p117 = por %p115, %p116
      %p118 = scmp.ne.s32.totalorder %s107, %s108
      %p119 = scmp.eq.s32.totalorder %s33, 0
      %p120 = por %p118, %p119
      %p121 = scmp.ne.s32.totalorder %s107, %s108
      %p122 = scmp.eq.s32.totalorder %s34, 1
      %p123 = por %p121, %p122
      %p125 = scmp.ne.s32.totalorder %s108, %s124
      %p126 = scmp.eq.s32.totalorder %s34, 0
      %p127 = por %p125, %p126
      %s129 = sadd.s32 %s128, 1
      %p132 = scmp.eq.s32.totalorder %s28, 1
      %p133 = scmp.ne.s32.totalorder %s128, %s130
      %p134 = scmp.eq.s32.totalorder %s28, 0
      %p135 = por %p133, %p134
      %p136 = scmp.ne.s32.totalorder %s128, %s130
      %p137 = scmp.eq.s32.totalorder %s33, 1
      %p138 = por %p136, %p137
      %p139 = scmp.ne.s32.totalorder %s130, %s131
      %p140 = scmp.eq.s32.totalorder %s33, 0
      %p141 = por %p139, %p140
      %p142 = scmp.ne.s32.totalorder %s130, %s131
      %p143 = scmp.eq.s32.totalorder %s34, 1
      %p144 = por %p142, %p143
      %p146 = scmp.ne.s32.totalorder %s131, %s145
      %p147 = scmp.eq.s32.totalorder %s34, 0
      %p148 = por %p146, %p147
      %s150 = sadd.s32 %s149, 1
      %p153 = scmp.eq.s32.totalorder %s28, 1
      %p154 = scmp.ne.s32.totalorder %s149, %s151
      %p155 = scmp.eq.s32.totalorder %s28, 0
      %p156 = por %p154, %p155
      %p157 = scmp.ne.s32.totalorder %s149, %s151
      %p158 = scmp.eq.s32.totalorder %s33, 1
      %p159 = por %p157, %p158
      %p160 = scmp.ne.s32.totalorder %s151, %s152
      %p161 = scmp.eq.s32.totalorder %s33, 0
      %p162 = por %p160, %p161
      %p163 = scmp.ne.s32.totalorder %s151, %s152
      %p164 = scmp.eq.s32.totalorder %s34, 1
      %p165 = por %p163, %p164
      %p167 = scmp.ne.s32.totalorder %s152, %s166
      %p168 = scmp.eq.s32.totalorder %s34, 0
      %p169 = por %p167, %p168
      %s171 = sadd.s32 %s170, 1
      %p174 = scmp.eq.s32.totalorder %s28, 1
      %p175 = scmp.ne.s32.totalorder %s170, %s172
      %p176 = scmp.eq.s32.totalorder %s28, 0
      %p177 = por %p175, %p176
      %p178 = scmp.ne.s32.totalorder %s170, %s172
      %p179 = scmp.eq.s32.totalorder %s33, 1
      %p180 = por %p178, %p179
      %p181 = scmp.ne.s32.totalorder %s172, %s173
      %p182 = scmp.eq.s32.totalorder %s33, 0
      %p183 = por %p181, %p182
      %p184 = scmp.ne.s32.totalorder %s172, %s173
      %p185 = scmp.eq.s32.totalorder %s34, 1
      %p186 = por %p184, %p185
      %p188 = scmp.ne.s32.totalorder %s173, %s187
      %p189 = scmp.eq.s32.totalorder %s34, 0
      %p190 = por %p188, %p189
      %s192 = sadd.s32 %s191, 1
      %p195 = scmp.eq.s32.totalorder %s28, 1
      %p196 = scmp.ne.s32.totalorder %s191, %s193
      %p197 = scmp.eq.s32.totalorder %s28, 0
      %p198 = por %p196, %p197
      %p199 = scmp.ne.s32.totalorder %s191, %s193
      %p200 = scmp.eq.s32.totalorder %s33, 1
      %p201 = por %p199, %p200
      %p202 = scmp.ne.s32.totalorder %s193, %s194
      %p203 = scmp.eq.s32.totalorder %s33, 0
      %p204 = por %p202, %p203
      %p205 = scmp.ne.s32.totalorder %s193, %s194
      %p206 = scmp.eq.s32.totalorder %s34, 1
      %p207 = por %p205, %p206
      %p209 = scmp.ne.s32.totalorder %s194, %s208
      %p210 = scmp.eq.s32.totalorder %s34, 0
      %p211 = por %p209, %p210
      %s213 = sadd.s32 %s212, 1
      %p216 = scmp.eq.s32.totalorder %s28, 1
      %p217 = scmp.ne.s32.totalorder %s212, %s214
      %p218 = scmp.eq.s32.totalorder %s28, 0
      %p219 = por %p217, %p218
      %p220 = scmp.ne.s32.totalorder %s212, %s214
      %p221 = scmp.eq.s32.totalorder %s33, 1
      %p222 = por %p220, %p221
      %p223 = scmp.ne.s32.totalorder %s214, %s215
      %p224 = scmp.eq.s32.totalorder %s33, 0
      %p225 = por %p223, %p224
      %p226 = scmp.ne.s32.totalorder %s214, %s215
      %p227 = scmp.eq.s32.totalorder %s34, 1
      %p228 = por %p226, %p227
      %p230 = scmp.ne.s32.totalorder %s215, %s229
      %p231 = scmp.eq.s32.totalorder %s34, 0
      %p232 = por %p230, %p231
      %s234 = sadd.s32 %s233, 1
      %p237 = scmp.eq.s32.totalorder %s28, 1
      %p238 = scmp.ne.s32.totalorder %s233, %s235
      %p239 = scmp.eq.s32.totalorder %s28, 0
      %p240 = por %p238, %p239
      %p241 = scmp.ne.s32.totalorder %s233, %s235
      %p242 = scmp.eq.s32.totalorder %s33, 1
      %p243 = por %p241, %p242
      %p244 = scmp.ne.s32.totalorder %s235, %s236
      %p245 = scmp.eq.s32.totalorder %s33, 0
      %p246 = por %p244, %p245
      %p247 = scmp.ne.s32.totalorder %s235, %s236
      %p248 = scmp.eq.s32.totalorder %s34, 1
      %p249 = por %p247, %p248
      %p251 = scmp.ne.s32.totalorder %s236, %s250
      %p252 = scmp.eq.s32.totalorder %s34, 0
      %p253 = por %p251, %p252
      %s255 = sadd.s32 %s254, 1
      %p258 = scmp.eq.s32.totalorder %s28, 1
      %p259 = scmp.ne.s32.totalorder %s254, %s256
      %p260 = scmp.eq.s32.totalorder %s28, 0
      %p261 = por %p259, %p260
      %p262 = scmp.ne.s32.totalorder %s254, %s256
      %p263 = scmp.eq.s32.totalorder %s33, 1
      %p264 = por %p262, %p263
      %p265 = scmp.ne.s32.totalorder %s256, %s257
      %p266 = scmp.eq.s32.totalorder %s33, 0
      %p267 = por %p265, %p266
      %p268 = scmp.ne.s32.totalorder %s256, %s257
      %p269 = scmp.eq.s32.totalorder %s34, 1
      %p270 = por %p268, %p269
      %p272 = scmp.ne.s32.totalorder %s257, %s271
      %p273 = scmp.eq.s32.totalorder %s34, 0
      %p274 = por %p272, %p273
      %s276 = sadd.s32 %s275, 1
      %p279 = scmp.eq.s32.totalorder %s28, 1
      %p280 = scmp.ne.s32.totalorder %s275, %s277
      %p281 = scmp.eq.s32.totalorder %s28, 0
      %p282 = por %p280, %p281
      %p283 = scmp.ne.s32.totalorder %s275, %s277
      %p284 = scmp.eq.s32.totalorder %s33, 1
      %p285 = por %p283, %p284
      %p286 = scmp.ne.s32.totalorder %s277, %s278
      %p287 = scmp.eq.s32.totalorder %s33, 0
      %p288 = por %p286, %p287
      %p289 = scmp.ne.s32.totalorder %s277, %s278
      %p290 = scmp.eq.s32.totalorder %s34, 1
      %p291 = por %p289, %p290
      %p293 = scmp.ne.s32.totalorder %s278, %s292
      %p294 = scmp.eq.s32.totalorder %s34, 0
      %p295 = por %p293, %p294
      %s296 = ssub.s32 %s35, %s47
      %s297 = ssub.s32 %s36, %s43
      %s298 = sor.u32 %s296, %s297
      %p299 = scmp.eq.s32.totalorder %s298, 0
      %s301 = sadd.s32 %s300, 1
      %s302 = scalar_select %p299, %s300, %s301
      %p305 = pneg %p299
      %p306 = scmp.eq.s32.totalorder %s28, 1
      %p307 = por %p305, %p306
      %p308 = scmp.ne.s32.totalorder %s300, %s303
      %p309 = scmp.eq.s32.totalorder %s28, 0
      %p310 = por %p308, %p309
      %p311 = scmp.ne.s32.totalorder %s300, %s303
      %p312 = scmp.eq.s32.totalorder %s33, 1
      %p313 = por %p311, %p312
      %p314 = scmp.ne.s32.totalorder %s303, %s304
      %p315 = scmp.eq.s32.totalorder %s33, 0
      %p316 = por %p314, %p315
      %p317 = scmp.ne.s32.totalorder %s303, %s304
      %p318 = scmp.eq.s32.totalorder %s34, 1
      %p319 = por %p317, %p318
      %p321 = scmp.ne.s32.totalorder %s304, %s320
      %p322 = scmp.eq.s32.totalorder %s34, 0
      %p323 = por %p321, %p322
      %p324 = scmp.le.s32.totalorder 1, %s28
      %p325 = scmp.lt.s32.totalorder %s28, 3
      %p326 = pnand %p324, %p325
      %p327 = pneg %p326
      // Predicated region
      $region9: #{attention_layer.1} parent=5 // pred_check
        _
      $region10: #{attention_layer.1} parent=5 // pred_check_branch
        %329 = sbr.rel (%p326) target = $region12
      $region11: #{attention_layer.1} parent=5 // pred_region
        %s330 = ssub.s32 %s28, 1
        // Predicated region
        $region13: #{attention_layer.1} parent=11 // pred_check
          %p331 = pneg %p141
        $region14: #{attention_layer.1} parent=11 // pred_check_branch
          %333 = sbr.rel (%p331) target = $region16
        $region15: #{attention_layer.1} parent=11 // pred_region
          _
        $region16: #{attention_layer.1} parent=11 // pred_fallthru
          _
        // Predicated region
        $region17: #{attention_layer.1} parent=11 // pred_check
          %p334 = pneg %p162
        $region18: #{attention_layer.1} parent=11 // pred_check_branch
          %336 = sbr.rel (%p334) target = $region20
        $region19: #{attention_layer.1} parent=11 // pred_region
          _
        $region20: #{attention_layer.1} parent=11 // pred_fallthru
          _
        // Predicated region
        $region21: #{attention_layer.1} parent=11 // pred_check
          %p337 = pneg %p183
        $region22: #{attention_layer.1} parent=11 // pred_check_branch
          %339 = sbr.rel (%p337) target = $region24
        $region23: #{attention_layer.1} parent=11 // pred_region
          %s341 = ssub.s32 256, 256
          %342 = vsyncadd [#allocation12], %s341
          %s343 = sshll.u32 [#allocation11], 4
          %s344 = int_to_ptr.vmem [resolvable:$true] %s343
          %349 = dma.hbm_to_vmem [thread:$0]  %s5, 256, %s344, [#allocation12], 64, 64, 4
        $region24: #{attention_layer.1} parent=11 // pred_fallthru
          _
        // Predicated region
        $region25: #{attention_layer.1} parent=11 // pred_check
          %p350 = pneg %p204
        $region26: #{attention_layer.1} parent=11 // pred_check_branch
          %352 = sbr.rel (%p350) target = $region28
        $region27: #{attention_layer.1} parent=11 // pred_region
          _
        $region28: #{attention_layer.1} parent=11 // pred_fallthru
          _
        // Predicated region
        $region29: #{attention_layer.1} parent=11 // pred_check
          %p353 = pneg %p225
        $region30: #{attention_layer.1} parent=11 // pred_check_branch
          %355 = sbr.rel (%p353) target = $region32
        $region31: #{attention_layer.1} parent=11 // pred_region
          _
        $region32: #{attention_layer.1} parent=11 // pred_fallthru
          _
        // Predicated region
        $region33: #{attention_layer.1} parent=11 // pred_check
          %p356 = pneg %p246
        $region34: #{attention_layer.1} parent=11 // pred_check_branch
          %358 = sbr.rel (%p356) target = $region36
        $region35: #{attention_layer.1} parent=11 // pred_region
          %s360 = ssub.s32 16, 16
          %361 = vsyncadd [#allocation12], %s360
          %s363 = sshll.u32 [#allocation13], 4
          %s364 = int_to_ptr.vmem [resolvable:$true] %s363
          %366 = dma.hbm_to_vmem [thread:$0]  %s8, 16, %s364, [#allocation12]
        $region36: #{attention_layer.1} parent=11 // pred_fallthru
          _
        // Predicated region
        $region37: #{attention_layer.1} parent=11 // pred_check
          %p367 = pneg %p267
        $region38: #{attention_layer.1} parent=11 // pred_check_branch
          %369 = sbr.rel (%p367) target = $region40
        $region39: #{attention_layer.1} parent=11 // pred_region
          %s371 = ssub.s32 256, 256
          %372 = vsyncadd [#allocation15], %s371
          %s373 = sshll.u32 [#allocation14], 4
          %s374 = int_to_ptr.vmem [resolvable:$true] %s373
          %379 = dma.hbm_to_vmem [thread:$0]  %s9, 256, %s374, [#allocation15], 64, 64, 4
        $region40: #{attention_layer.1} parent=11 // pred_fallthru
          _
        // Predicated region
        $region41: #{attention_layer.1} parent=11 // pred_check
          %p380 = pneg %p288
        $region42: #{attention_layer.1} parent=11 // pred_check_branch
          %382 = sbr.rel (%p380) target = $region44
        $region43: #{attention_layer.1} parent=11 // pred_region
          %s384 = ssub.s32 16, 16
          %385 = vsyncadd [#allocation15], %s384
          %s387 = sshll.u32 [#allocation16], 4
          %s388 = int_to_ptr.vmem [resolvable:$true] %s387
          %390 = dma.hbm_to_vmem [thread:$0]  %s10, 16, %s388, [#allocation15]
        $region44: #{attention_layer.1} parent=11 // pred_fallthru
          _
      $region12: #{attention_layer.1} parent=5 // pred_fallthru
        _
      %p391 = scmp.lt.s32.totalorder %s28, 2
      // Predicated region
      $region45: #{attention_layer.1} parent=5 // pred_check
        %p392 = pneg %p391
      $region46: #{attention_layer.1} parent=5 // pred_check_branch
        %394 = sbr.rel (%p392) target = $region48
      $region47: #{attention_layer.1} parent=5 // pred_region
        // Predicated region
        $region49: #{attention_layer.1} parent=47 // pred_check
          %p395 = pneg %p62
        $region50: #{attention_layer.1} parent=47 // pred_check_branch
          %397 = sbr.rel (%p395) target = $region52
        $region51: #{attention_layer.1} parent=47 // pred_region
          %s398 = sand.u32 %s52, 1
          %s399 = scalar_lea.sflag [#allocation6], %s398
          %s400 = sand.u32 %s52, 1
          %s401 = smul.addr %s400, 8
          %s402 = scalar_lea.vmem [#allocation5], %s401
          %s404 = ssub.s32 128, 128
          %405 = vsyncadd %s399, %s404
          %s406 = sadd.s32 %s36, %s35
          %s407 = smul.addr %s406, 128
          %s408 = scalar_lea.hbm %s0, %s407
          %s410 = sshll.u32 %s402, 4
          %s411 = int_to_ptr.vmem [resolvable:$true] %s410
          %413 = dma.hbm_to_vmem [thread:$0]  %s408, 128, %s411, %s399
        $region52: #{attention_layer.1} parent=47 // pred_fallthru
          _
        // Predicated region
        $region53: #{attention_layer.1} parent=47 // pred_check
          %p414 = pneg %p88
        $region54: #{attention_layer.1} parent=47 // pred_check_branch
          %416 = sbr.rel (%p414) target = $region56
        $region55: #{attention_layer.1} parent=47 // pred_region
          %s417 = sand.u32 %s28, 1
          %s418 = scalar_lea.sflag [#allocation9], %s417
          %s419 = sand.u32 %s78, 1
          %s420 = smul.addr %s419, 8
          %s421 = scalar_lea.vmem [#allocation8], %s420
          %s423 = ssub.s32 128, 128
          %424 = vsyncadd %s418, %s423
          %s425 = smul.addr %s35, 128
          %s426 = scalar_lea.hbm %s1, %s425
          %s428 = sshll.u32 %s421, 4
          %s429 = int_to_ptr.vmem [resolvable:$true] %s428
          %431 = dma.hbm_to_vmem [thread:$0]  %s426, 128, %s429, %s418
        $region56: #{attention_layer.1} parent=47 // pred_fallthru
          _
        // Predicated region
        $region57: #{attention_layer.1} parent=47 // pred_check
          %p432 = pneg %p114
        $region58: #{attention_layer.1} parent=47 // pred_check_branch
          %434 = sbr.rel (%p432) target = $region60
        $region59: #{attention_layer.1} parent=47 // pred_region
          %s435 = sand.u32 %s28, 1
          %s436 = scalar_lea.sflag [#allocation9], %s435
          %s437 = sand.u32 %s104, 1
          %s438 = smul.addr %s437, 8
          %s439 = scalar_lea.vmem [#allocation10], %s438
          %s441 = ssub.s32 128, 128
          %442 = vsyncadd %s436, %s441
          %s443 = smul.addr %s35, 128
          %s444 = scalar_lea.hbm %s2, %s443
          %s446 = sshll.u32 %s439, 4
          %s447 = int_to_ptr.vmem [resolvable:$true] %s446
          %449 = dma.hbm_to_vmem [thread:$0]  %s444, 128, %s447, %s436
        $region60: #{attention_layer.1} parent=47 // pred_fallthru
          _
      $region48: #{attention_layer.1} parent=5 // pred_fallthru
        _
      %p450 = scmp.le.s32.totalorder 1, %s28
      %p451 = scmp.lt.s32.totalorder %s28, 3
      %p452 = pnand %p450, %p451
      %p453 = pneg %p452
      // Predicated region
      $region61: #{attention_layer.1} parent=5 // pred_check
        _
      $region62: #{attention_layer.1} parent=5 // pred_check_branch
        %455 = sbr.rel (%p452) target = $region64
      $region63: #{attention_layer.1} parent=5 // pred_region
        %s456 = ssub.s32 %s28, 1
        %s457 = sand.u32 %s55, 1
        %s458 = scalar_lea.sflag [#allocation6], %s457
        %s459 = sand.u32 %s55, 1
        %s460 = smul.addr %s459, 8
        %s461 = scalar_lea.vmem [#allocation5], %s460
        // Predicated region
        $region65: #{attention_layer.1} parent=63 // pred_check
          %p462 = pneg %p68
        $region66: #{attention_layer.1} parent=63 // pred_check_branch
          %464 = sbr.rel (%p462) target = $region68
        $region67: #{attention_layer.1} parent=63 // pred_region
          %465 = dma.done %s458, 128
        $region68: #{attention_layer.1} parent=63 // pred_fallthru
          _
        %s466 = sand.u32 %s33, 1
        %s467 = scalar_lea.sflag [#allocation9], %s466
        %s468 = sand.u32 %s81, 1
        %s469 = smul.addr %s468, 8
        %s470 = scalar_lea.vmem [#allocation8], %s469
        // Predicated region
        $region69: #{attention_layer.1} parent=63 // pred_check
          %p471 = pneg %p94
        $region70: #{attention_layer.1} parent=63 // pred_check_branch
          %473 = sbr.rel (%p471) target = $region72
        $region71: #{attention_layer.1} parent=63 // pred_region
          %474 = dma.done %s467, 128
        $region72: #{attention_layer.1} parent=63 // pred_fallthru
          _
        %s475 = sand.u32 %s33, 1
        %s476 = scalar_lea.sflag [#allocation9], %s475
        %s477 = sand.u32 %s107, 1
        %s478 = smul.addr %s477, 8
        %s479 = scalar_lea.vmem [#allocation10], %s478
        // Predicated region
        $region73: #{attention_layer.1} parent=63 // pred_check
          %p480 = pneg %p120
        $region74: #{attention_layer.1} parent=63 // pred_check_branch
          %482 = sbr.rel (%p480) target = $region76
        $region75: #{attention_layer.1} parent=63 // pred_region
          %483 = dma.done %s476, 128
        $region76: #{attention_layer.1} parent=63 // pred_fallthru
          _
        // Predicated region
        $region77: #{attention_layer.1} parent=63 // pred_check
          %p484 = pneg %p183
        $region78: #{attention_layer.1} parent=63 // pred_check_branch
          %486 = sbr.rel (%p484) target = $region80
        $region79: #{attention_layer.1} parent=63 // pred_region
          %487 = dma.done [#allocation12], 256
        $region80: #{attention_layer.1} parent=63 // pred_fallthru
          _
        // Predicated region
        $region81: #{attention_layer.1} parent=63 // pred_check
          %p488 = pneg %p246
        $region82: #{attention_layer.1} parent=63 // pred_check_branch
          %490 = sbr.rel (%p488) target = $region84
        $region83: #{attention_layer.1} parent=63 // pred_region
          %491 = dma.done [#allocation12], 16
        $region84: #{attention_layer.1} parent=63 // pred_fallthru
          _
        // Predicated region
        $region85: #{attention_layer.1} parent=63 // pred_check
          %p492 = pneg %p267
        $region86: #{attention_layer.1} parent=63 // pred_check_branch
          %494 = sbr.rel (%p492) target = $region88
        $region87: #{attention_layer.1} parent=63 // pred_region
          %495 = dma.done [#allocation15], 256
        $region88: #{attention_layer.1} parent=63 // pred_fallthru
          _
        // Predicated region
        $region89: #{attention_layer.1} parent=63 // pred_check
          %p496 = pneg %p288
        $region90: #{attention_layer.1} parent=63 // pred_check_branch
          %498 = sbr.rel (%p496) target = $region92
        $region91: #{attention_layer.1} parent=63 // pred_region
          %499 = dma.done [#allocation15], 16
        $region92: #{attention_layer.1} parent=63 // pred_fallthru
          _
        %s500 = sand.u32 %s55, 1
        %s501 = scalar_lea.sflag [#allocation6], %s500
        %s502 = sand.u32 %s55, 1
        %s503 = smul.addr %s502, 8
        %s504 = scalar_lea.vmem [#allocation5], %s503
        %p505 = pneg %p68
        %p506 = pneg %p65
        %s507 = sand.u32 %s33, 1
        %s508 = scalar_lea.sflag [#allocation9], %s507
        %s509 = sand.u32 %s81, 1
        %s510 = smul.addr %s509, 8
        %s511 = scalar_lea.vmem [#allocation8], %s510
        %p512 = pneg %p94
        %p513 = pneg %p91
        %s514 = sand.u32 %s33, 1
        %s515 = scalar_lea.sflag [#allocation9], %s514
        %s516 = sand.u32 %s107, 1
        %s517 = smul.addr %s516, 8
        %s518 = scalar_lea.vmem [#allocation10], %s517
        %p519 = pneg %p120
        %p520 = pneg %p117
        %p521 = pneg %p141
        %p522 = pneg %p138
        %p523 = pneg %p162
        %p524 = pneg %p159
        %p525 = pneg %p183
        %p526 = pneg %p180
        %p527 = pneg %p204
        %p528 = pneg %p201
        %p529 = pneg %p225
        %p530 = pneg %p222
        %p531 = pneg %p246
        %p532 = pneg %p243
        %p533 = pneg %p267
        %p534 = pneg %p264
        %p535 = pneg %p288
        %p536 = pneg %p285
        %p537 = pneg %p316
        %p538 = pneg %p313
        %s539 = sand.u32 %s303, 1
        %s540 = scalar_lea.sflag [#allocation7], %s539
        %s541 = sand.u32 %s303, 1
        %s542 = smul.addr %s541, 8
        %s543 = scalar_lea.vmem [#allocation17], %s542
        %p545 = scmp.eq.s32.totalorder %s38, 0
        // Predicated region
        $region93: #{attention_layer.1} parent=63 // pred_check
          %p546 = pneg %p545
        $region94: #{attention_layer.1} parent=63 // pred_check_branch
          %548 = sbr.rel (%p546) target = $region96
        $region95: #{attention_layer.1} parent=63 // pred_region
          %v549 = vld [vmem:[%s470] sm:$0xff]
          %v550 = vpack.c.bf16 %v549, %v549
          %v551 = vld [vmem:[#allocation11] sm:$0xf]
          %v552 = vld [vmem:[#allocation11 + $0x4] sm:$0xf]
          %v553 = vld [vmem:[#allocation11 + $0x8] sm:$0xf]
          %v554 = vld [vmem:[#allocation11 + $0xc] sm:$0xf]
          %v555 = vld [vmem:[%s6] sm:$0x1]
          %v557 = vlaneseq
          %v558 = vshrl.u32 %v557, 7
          %v559 = vsub.s32 0, %v558
          %v560 = vrot.slane %v555, %v559
          %v566 = vunpack.c.l.b16 %v551
          %v567 = vunpack.c.l.b16 %v552
          %v568 = vunpack.c.l.b16 %v553
          %v569 = vunpack.c.l.b16 %v554
          %v570 = vpack.c.b16 %v567, %v566
          %v571 = vpack.c.b16 %v569, %v568
          %vm574 = vcmask 261120
          %v576 = vsel %vm574, %v550, 0
          %578 = vmatprep.subr.bf16.mxu0 0
          %579 = vmatpush1.bf16.msra.mxu0 %v570
          %580 = vmatprep.subr.bf16.mxu0 0
          %581 = vmatpush1.bf16.msra.mxu0 %v571
          %582 = vmatprep.subr.bf16.mxu0 0
          %583 = vmatpush1.bf16.msra.mxu0 0
          %584 = vmatprep.subr.bf16.mxu0 0
          %585 = vmatpush1.bf16.msra.mxu0 0
          %586 = vmatprep.subr.bf16.mxu0 0
          %587 = vmatpush1.bf16.msra.mxu0 0
          %588 = vmatprep.subr.bf16.mxu0 0
          %589 = vmatpush1.bf16.msra.mxu0 0
          %590 = vmatprep.subr.bf16.mxu0 0
          %591 = vmatpush1.bf16.msra.mxu0 0
          %592 = vmatprep.subr.bf16.mxu0 0
          %593 = vmatpush1.bf16.msra.mxu0 0
          %594 = vmatprep.subr.bf16.mxu0 0
          %595 = vmatpush1.bf16.msra.mxu0 0
          %596 = vmatprep.subr.bf16.mxu0 0
          %597 = vmatpush1.bf16.msra.mxu0 0
          %598 = vmatprep.subr.bf16.mxu0 0
          %599 = vmatpush1.bf16.msra.mxu0 0
          %600 = vmatprep.subr.bf16.mxu0 0
          %601 = vmatpush1.bf16.msra.mxu0 0
          %602 = vmatprep.subr.bf16.mxu0 0
          %603 = vmatpush1.bf16.msra.mxu0 0
          %604 = vmatprep.subr.bf16.mxu0 0
          %605 = vmatpush1.bf16.msra.mxu0 0
          %606 = vmatprep.subr.bf16.mxu0 0
          %607 = vmatpush1.bf16.msra.mxu0 0
          %608 = vmatprep.subr.bf16.mxu0 0
          %609 = vmatpush1.bf16.msra.mxu0 0
          %610 = vmatprep.mubr.bf16.mxu0 0
          %611 = vmatmul.mubr.bf16.gmra.mrb[0].mxu0 %v576
          %v612 = vpop.f32.mrb[0].mxu0
          %v613 = vadd.f32 %v560, %v612
          %v614 = vpop.f32.mrb[0].mxu0
          %v615 = vpop.f32.mrb[0].mxu0
          %v616 = vpop.f32.mrb[0].mxu0
          %617 = vdwg.mxu0
          %v618 = vld [vmem:[%s479] sm:$0xff]
          %v619 = vpack.c.bf16 %v618, %v618
          %v620 = vld [vmem:[%s7] sm:$0xf]
          %v621 = vld [vmem:[%s7 + $0x4] sm:$0xf]
          %v622 = vld [vmem:[%s7 + $0x8] sm:$0xf]
          %v623 = vld [vmem:[%s7 + $0xc] sm:$0xf]
          %v624 = vld [vmem:[#allocation13] sm:$0x1]
          %v626 = vlaneseq
          %v627 = vshrl.u32 %v626, 7
          %v628 = vsub.s32 0, %v627
          %v629 = vrot.slane %v624, %v628
          %v635 = vunpack.c.l.b16 %v620
          %v636 = vunpack.c.l.b16 %v621
          %v637 = vunpack.c.l.b16 %v622
          %v638 = vunpack.c.l.b16 %v623
          %v639 = vpack.c.b16 %v636, %v635
          %v640 = vpack.c.b16 %v638, %v637
          %v644 = vsel %vm574, %v619, 0
          %646 = vmatprep.subr.bf16.mxu0 0
          %647 = vmatpush1.bf16.msra.mxu0 %v639
          %648 = vmatprep.subr.bf16.mxu0 0
          %649 = vmatpush1.bf16.msra.mxu0 %v640
          %650 = vmatprep.subr.bf16.mxu0 0
          %651 = vmatpush1.bf16.msra.mxu0 0
          %652 = vmatprep.subr.bf16.mxu0 0
          %653 = vmatpush1.bf16.msra.mxu0 0
          %654 = vmatprep.subr.bf16.mxu0 0
          %655 = vmatpush1.bf16.msra.mxu0 0
          %656 = vmatprep.subr.bf16.mxu0 0
          %657 = vmatpush1.bf16.msra.mxu0 0
          %658 = vmatprep.subr.bf16.mxu0 0
          %659 = vmatpush1.bf16.msra.mxu0 0
          %660 = vmatprep.subr.bf16.mxu0 0
          %661 = vmatpush1.bf16.msra.mxu0 0
          %662 = vmatprep.subr.bf16.mxu0 0
          %663 = vmatpush1.bf16.msra.mxu0 0
          %664 = vmatprep.subr.bf16.mxu0 0
          %665 = vmatpush1.bf16.msra.mxu0 0
          %666 = vmatprep.subr.bf16.mxu0 0
          %667 = vmatpush1.bf16.msra.mxu0 0
          %668 = vmatprep.subr.bf16.mxu0 0
          %669 = vmatpush1.bf16.msra.mxu0 0
          %670 = vmatprep.subr.bf16.mxu0 0
          %671 = vmatpush1.bf16.msra.mxu0 0
          %672 = vmatprep.subr.bf16.mxu0 0
          %673 = vmatpush1.bf16.msra.mxu0 0
          %674 = vmatprep.subr.bf16.mxu0 0
          %675 = vmatpush1.bf16.msra.mxu0 0
          %676 = vmatprep.subr.bf16.mxu0 0
          %677 = vmatpush1.bf16.msra.mxu0 0
          %678 = vmatprep.mubr.bf16.mxu0 0
          %679 = vmatmul.mubr.bf16.gmra.mrb[0].mxu0 %v644
          %v680 = vpop.f32.mrb[0].mxu0
          %v681 = vadd.f32 %v629, %v680
          %v682 = vpop.f32.mrb[0].mxu0
          %v683 = vpop.f32.mrb[0].mxu0
          %v684 = vpop.f32.mrb[0].mxu0
          %685 = vdwg.mxu0
          %v686 = vpack.c.bf16 %v613, %v613
          %vm687 = vcmask 257024
          %688 = vst.msk [vmem:[#allocation2] sm:$0xf] %vm687, %v686
          %v689 = vpack.c.bf16 %v681, %v681
          %690 = vst.msk [vmem:[#allocation3] sm:$0xf] %vm687, %v689
        $region96: #{attention_layer.1} parent=63 // pred_fallthru
          _
        %v691 = vld [vmem:[%s461] sm:$0xff]
        %v692 = vpack.c.bf16 %v691, %v691
        %v693 = vld [vmem:[%s3] sm:$0xf]
        %v694 = vld [vmem:[%s3 + $0x4] sm:$0xf]
        %v695 = vld [vmem:[%s3 + $0x8] sm:$0xf]
        %v696 = vld [vmem:[%s3 + $0xc] sm:$0xf]
        %v697 = vld [vmem:[%s4] sm:$0x1]
        %v699 = vlaneseq
        %v700 = vshrl.u32 %v699, 7
        %v701 = vsub.s32 0, %v700
        %v702 = vrot.slane %v697, %v701
        %v708 = vunpack.c.l.b16 %v693
        %v709 = vunpack.c.l.b16 %v694
        %v710 = vunpack.c.l.b16 %v695
        %v711 = vunpack.c.l.b16 %v696
        %v712 = vpack.c.b16 %v709, %v708
        %v713 = vpack.c.b16 %v711, %v710
        %vm716 = vcmask 261120
        %v718 = vsel %vm716, %v692, 0
        %720 = vmatprep.subr.bf16.mxu0 0
        %721 = vmatpush1.bf16.msra.mxu0 %v712
        %722 = vmatprep.subr.bf16.mxu0 0
        %723 = vmatpush1.bf16.msra.mxu0 %v713
        %724 = vmatprep.subr.bf16.mxu0 0
        %725 = vmatpush1.bf16.msra.mxu0 0
        %726 = vmatprep.subr.bf16.mxu0 0
        %727 = vmatpush1.bf16.msra.mxu0 0
        %728 = vmatprep.subr.bf16.mxu0 0
        %729 = vmatpush1.bf16.msra.mxu0 0
        %730 = vmatprep.subr.bf16.mxu0 0
        %731 = vmatpush1.bf16.msra.mxu0 0
        %732 = vmatprep.subr.bf16.mxu0 0
        %733 = vmatpush1.bf16.msra.mxu0 0
        %734 = vmatprep.subr.bf16.mxu0 0
        %735 = vmatpush1.bf16.msra.mxu0 0
        %736 = vmatprep.subr.bf16.mxu0 0
        %737 = vmatpush1.bf16.msra.mxu0 0
        %738 = vmatprep.subr.bf16.mxu0 0
        %739 = vmatpush1.bf16.msra.mxu0 0
        %740 = vmatprep.subr.bf16.mxu0 0
        %741 = vmatpush1.bf16.msra.mxu0 0
        %742 = vmatprep.subr.bf16.mxu0 0
        %743 = vmatpush1.bf16.msra.mxu0 0
        %744 = vmatprep.subr.bf16.mxu0 0
        %745 = vmatpush1.bf16.msra.mxu0 0
        %746 = vmatprep.subr.bf16.mxu0 0
        %747 = vmatpush1.bf16.msra.mxu0 0
        %748 = vmatprep.subr.bf16.mxu0 0
        %749 = vmatpush1.bf16.msra.mxu0 0
        %750 = vmatprep.subr.bf16.mxu0 0
        %751 = vmatpush1.bf16.msra.mxu0 0
        %752 = vmatprep.mubr.bf16.mxu0 0
        %753 = vmatmul.mubr.bf16.gmra.mrb[0].mxu0 %v718
        %v754 = vpop.f32.mrb[0].mxu0
        %v755 = vadd.f32 %v702, %v754
        %v756 = vpop.f32.mrb[0].mxu0
        %v757 = vpop.f32.mrb[0].mxu0
        %v758 = vpop.f32.mrb[0].mxu0
        %759 = vdwg.mxu0
        %v760 = vpack.c.bf16 %v755, %v755
        %v761 = vld [vmem:[#allocation2] sm:$0xf]
        %v762 = vld [vmem:[#allocation3] sm:$0xf]
        %vm763 = vcmask 64512
        %v765 = vsel %vm763, %v760, 0
        %v768 = vsel %vm763, %v761, 0
        %770 = vmatprep.subr.bf16.mxu0 0
        %771 = vmatpush1.bf16.xpose.msra.mxu0 %v768
        %772 = vmatprep.subr.bf16.mxu0 0
        %773 = vmatpush1.bf16.xpose.msra.mxu0 0
        %774 = vmatprep.subr.bf16.mxu0 0
        %775 = vmatpush1.bf16.xpose.msra.mxu0 0
        %776 = vmatprep.subr.bf16.mxu0 0
        %777 = vmatpush1.bf16.xpose.msra.mxu0 0
        %778 = vmatprep.subr.bf16.mxu0 0
        %779 = vmatpush1.bf16.xpose.msra.mxu0 0
        %780 = vmatprep.subr.bf16.mxu0 0
        %781 = vmatpush1.bf16.xpose.msra.mxu0 0
        %782 = vmatprep.subr.bf16.mxu0 0
        %783 = vmatpush1.bf16.xpose.msra.mxu0 0
        %784 = vmatprep.subr.bf16.mxu0 0
        %785 = vmatpush1.bf16.xpose.msra.mxu0 0
        %786 = vmatprep.subr.bf16.mxu0 0
        %787 = vmatpush1.bf16.xpose.msra.mxu0 0
        %788 = vmatprep.subr.bf16.mxu0 0
        %789 = vmatpush1.bf16.xpose.msra.mxu0 0
        %790 = vmatprep.subr.bf16.mxu0 0
        %791 = vmatpush1.bf16.xpose.msra.mxu0 0
        %792 = vmatprep.subr.bf16.mxu0 0
        %793 = vmatpush1.bf16.xpose.msra.mxu0 0
        %794 = vmatprep.subr.bf16.mxu0 0
        %795 = vmatpush1.bf16.xpose.msra.mxu0 0
        %796 = vmatprep.subr.bf16.mxu0 0
        %797 = vmatpush1.bf16.xpose.msra.mxu0 0
        %798 = vmatprep.subr.bf16.mxu0 0
        %799 = vmatpush1.bf16.xpose.msra.mxu0 0
        %800 = vmatprep.subr.bf16.mxu0 0
        %801 = vmatpush1.bf16.xpose.msra.mxu0 0
        %802 = vmatprep.mubr.bf16.mxu0 0
        %803 = vmatmul.mubr.bf16.gmra.mrb[0].mxu0 %v765
        %v804 = vpop.f32.mrb[0].mxu0
        %v805 = vadd.f32 0.0, %v804
        %v806 = vpop.f32.mrb[0].mxu0
        %v807 = vpop.f32.mrb[0].mxu0
        %v808 = vpop.f32.mrb[0].mxu0
        %809 = vdwg.mxu0
        %v810 = vsel %vm763, %v805, -inf
        %811 = vmax.xlane.f32.xlu0 %v810
        %v812 = vpop.xlane.xlu0 %811
        %v813 = vsub.f32 %v805, %v812
        %v814 = vmul.f32 %v813, 1.442695
        %v815 = vpow.pop %v814
        %v816 = vsel %vm763, %v815, 0.0
        %817 = vadd.xlane.f32.xlu0 %v816
        %v818 = vpop.xlane.xlu0 %817
        %v819 = vrcp.pop %v818
        %v820 = vpack.c.bf16 %v815, %v815
        %v822 = vsel %vm763, %v820, 0
        %vm824 = vcmask 1043456
        %v826 = vsel %vm824, %v762, 0
        %828 = vmatprep.subr.bf16.mxu0 0
        %829 = vmatpush1.bf16.msra.mxu0 %v826
        %830 = vmatprep.subr.bf16.mxu0 0
        %831 = vmatpush1.bf16.msra.mxu0 0
        %832 = vmatprep.subr.bf16.mxu0 0
        %833 = vmatpush1.bf16.msra.mxu0 0
        %834 = vmatprep.subr.bf16.mxu0 0
        %835 = vmatpush1.bf16.msra.mxu0 0
        %836 = vmatprep.subr.bf16.mxu0 0
        %837 = vmatpush1.bf16.msra.mxu0 0
        %838 = vmatprep.subr.bf16.mxu0 0
        %839 = vmatpush1.bf16.msra.mxu0 0
        %840 = vmatprep.subr.bf16.mxu0 0
        %841 = vmatpush1.bf16.msra.mxu0 0
        %842 = vmatprep.subr.bf16.mxu0 0
        %843 = vmatpush1.bf16.msra.mxu0 0
        %844 = vmatprep.subr.bf16.mxu0 0
        %845 = vmatpush1.bf16.msra.mxu0 0
        %846 = vmatprep.subr.bf16.mxu0 0
        %847 = vmatpush1.bf16.msra.mxu0 0
        %848 = vmatprep.subr.bf16.mxu0 0
        %849 = vmatpush1.bf16.msra.mxu0 0
        %850 = vmatprep.subr.bf16.mxu0 0
        %851 = vmatpush1.bf16.msra.mxu0 0
        %852 = vmatprep.subr.bf16.mxu0 0
        %853 = vmatpush1.bf16.msra.mxu0 0
        %854 = vmatprep.subr.bf16.mxu0 0
        %855 = vmatpush1.bf16.msra.mxu0 0
        %856 = vmatprep.subr.bf16.mxu0 0
        %857 = vmatpush1.bf16.msra.mxu0 0
        %858 = vmatprep.subr.bf16.mxu0 0
        %859 = vmatpush1.bf16.msra.mxu0 0
        %860 = vmatprep.mubr.bf16.mxu0 0
        %861 = vmatmul.mubr.bf16.gmra.mrb[0].mxu0 %v822
        %v862 = vpop.f32.mrb[0].mxu0
        %v863 = vadd.f32 0.0, %v862
        %v864 = vpop.f32.mrb[0].mxu0
        %v865 = vpop.f32.mrb[0].mxu0
        %v866 = vpop.f32.mrb[0].mxu0
        %867 = vdwg.mxu0
        %v868 = vmul.f32 %v863, %v819
        %v869 = vpack.c.bf16 %v868, %v868
        %vm870 = vcmask 60416
        %871 = vst.msk [vmem:[#allocation4] sm:$0xf] %vm870, %v869
        %873 = vrot.lane.b32.xlu0 %v760, 120
        %v874 = vpop.permute.xlu0 %873
        %v876 = vunpack.c.l.b16 %v761
        %v877 = vpack.c.b16 %v876, %v876
        %878 = vrot.lane.b32.xlu0 %v877, 120
        %v879 = vpop.permute.xlu0 %878
        %v881 = vsel %vm763, %v874, 0
        %v884 = vsel %vm763, %v879, 0
        %886 = vmatprep.subr.bf16.mxu0 0
        %887 = vmatpush1.bf16.xpose.msra.mxu0 %v884
        %888 = vmatprep.subr.bf16.mxu0 0
        %889 = vmatpush1.bf16.xpose.msra.mxu0 0
        %890 = vmatprep.subr.bf16.mxu0 0
        %891 = vmatpush1.bf16.xpose.msra.mxu0 0
        %892 = vmatprep.subr.bf16.mxu0 0
        %893 = vmatpush1.bf16.xpose.msra.mxu0 0
        %894 = vmatprep.subr.bf16.mxu0 0
        %895 = vmatpush1.bf16.xpose.msra.mxu0 0
        %896 = vmatprep.subr.bf16.mxu0 0
        %897 = vmatpush1.bf16.xpose.msra.mxu0 0
        %898 = vmatprep.subr.bf16.mxu0 0
        %899 = vmatpush1.bf16.xpose.msra.mxu0 0
        %900 = vmatprep.subr.bf16.mxu0 0
        %901 = vmatpush1.bf16.xpose.msra.mxu0 0
        %902 = vmatprep.subr.bf16.mxu0 0
        %903 = vmatpush1.bf16.xpose.msra.mxu0 0
        %904 = vmatprep.subr.bf16.mxu0 0
        %905 = vmatpush1.bf16.xpose.msra.mxu0 0
        %906 = vmatprep.subr.bf16.mxu0 0
        %907 = vmatpush1.bf16.xpose.msra.mxu0 0
        %908 = vmatprep.subr.bf16.mxu0 0
        %909 = vmatpush1.bf16.xpose.msra.mxu0 0
        %910 = vmatprep.subr.bf16.mxu0 0
        %911 = vmatpush1.bf16.xpose.msra.mxu0 0
        %912 = vmatprep.subr.bf16.mxu0 0
        %913 = vmatpush1.bf16.xpose.msra.mxu0 0
        %914 = vmatprep.subr.bf16.mxu0 0
        %915 = vmatpush1.bf16.xpose.msra.mxu0 0
        %916 = vmatprep.subr.bf16.mxu0 0
        %917 = vmatpush1.bf16.xpose.msra.mxu0 0
        %918 = vmatprep.mubr.bf16.mxu0 0
        %919 = vmatmul.mubr.bf16.gmra.mrb[0].mxu0 %v881
        %v920 = vpop.f32.mrb[0].mxu0
        %v921 = vadd.f32 0.0, %v920
        %v922 = vpop.f32.mrb[0].mxu0
        %v923 = vpop.f32.mrb[0].mxu0
        %v924 = vpop.f32.mrb[0].mxu0
        %925 = vdwg.mxu0
        %v926 = vsel %vm763, %v921, -inf
        %927 = vmax.xlane.f32.xlu0 %v926
        %v928 = vpop.xlane.xlu0 %927
        %v929 = vsub.f32 %v921, %v928
        %v930 = vmul.f32 %v929, 1.442695
        %v931 = vpow.pop %v930
        %v932 = vsel %vm763, %v931, 0.0
        %933 = vadd.xlane.f32.xlu0 %v932
        %v934 = vpop.xlane.xlu0 %933
        %v935 = vrcp.pop %v934
        %v936 = vpack.c.bf16 %v931, %v931
        %v938 = vunpack.c.l.b16 %v762
        %v939 = vpack.c.b16 %v938, %v938
        %940 = vrot.lane.b32.xlu0 %v939, 120
        %v941 = vpop.permute.xlu0 %940
        %v943 = vsel %vm763, %v936, 0
        %v946 = vsel %vm824, %v941, 0
        %948 = vmatprep.subr.bf16.mxu0 0
        %949 = vmatpush1.bf16.msra.mxu0 %v946
        %950 = vmatprep.subr.bf16.mxu0 0
        %951 = vmatpush1.bf16.msra.mxu0 0
        %952 = vmatprep.subr.bf16.mxu0 0
        %953 = vmatpush1.bf16.msra.mxu0 0
        %954 = vmatprep.subr.bf16.mxu0 0
        %955 = vmatpush1.bf16.msra.mxu0 0
        %956 = vmatprep.subr.bf16.mxu0 0
        %957 = vmatpush1.bf16.msra.mxu0 0
        %958 = vmatprep.subr.bf16.mxu0 0
        %959 = vmatpush1.bf16.msra.mxu0 0
        %960 = vmatprep.subr.bf16.mxu0 0
        %961 = vmatpush1.bf16.msra.mxu0 0
        %962 = vmatprep.subr.bf16.mxu0 0
        %963 = vmatpush1.bf16.msra.mxu0 0
        %964 = vmatprep.subr.bf16.mxu0 0
        %965 = vmatpush1.bf16.msra.mxu0 0
        %966 = vmatprep.subr.bf16.mxu0 0
        %967 = vmatpush1.bf16.msra.mxu0 0
        %968 = vmatprep.subr.bf16.mxu0 0
        %969 = vmatpush1.bf16.msra.mxu0 0
        %970 = vmatprep.subr.bf16.mxu0 0
        %971 = vmatpush1.bf16.msra.mxu0 0
        %972 = vmatprep.subr.bf16.mxu0 0
        %973 = vmatpush1.bf16.msra.mxu0 0
        %974 = vmatprep.subr.bf16.mxu0 0
        %975 = vmatpush1.bf16.msra.mxu0 0
        %976 = vmatprep.subr.bf16.mxu0 0
        %977 = vmatpush1.bf16.msra.mxu0 0
        %978 = vmatprep.subr.bf16.mxu0 0
        %979 = vmatpush1.bf16.msra.mxu0 0
        %980 = vmatprep.mubr.bf16.mxu0 0
        %981 = vmatmul.mubr.bf16.gmra.mrb[0].mxu0 %v943
        %v982 = vpop.f32.mrb[0].mxu0
        %v983 = vadd.f32 0.0, %v982
        %v984 = vpop.f32.mrb[0].mxu0
        %v985 = vpop.f32.mrb[0].mxu0
        %v986 = vpop.f32.mrb[0].mxu0
        %987 = vdwg.mxu0
        %v988 = vmul.f32 %v983, %v935
        %v989 = vpack.c.bf16 %v988, %v988
        %v991 = vunpack.c.l.b16 %v989
        %v992 = vpack.c.b16 %v991, %v991
        %993 = vrot.lane.b32.xlu0 %v992, 8
        %v994 = vpop.permute.xlu0 %993
        %vm996 = vcmask 126016
        %997 = vst.msk [vmem:[#allocation4] sm:$0xf] %vm996, %v994
        %998 = vrot.lane.b32.xlu0 %v760, 112
        %v999 = vpop.permute.xlu0 %998
        %1000 = vrot.lane.b32.xlu0 %v877, 112
        %v1001 = vpop.permute.xlu0 %1000
        %v1003 = vsel %vm763, %v999, 0
        %v1006 = vsel %vm763, %v1001, 0
        %1008 = vmatprep.subr.bf16.mxu0 0
        %1009 = vmatpush1.bf16.xpose.msra.mxu0 %v1006
        %1010 = vmatprep.subr.bf16.mxu0 0
        %1011 = vmatpush1.bf16.xpose.msra.mxu0 0
        %1012 = vmatprep.subr.bf16.mxu0 0
        %1013 = vmatpush1.bf16.xpose.msra.mxu0 0
        %1014 = vmatprep.subr.bf16.mxu0 0
        %1015 = vmatpush1.bf16.xpose.msra.mxu0 0
        %1016 = vmatprep.subr.bf16.mxu0 0
        %1017 = vmatpush1.bf16.xpose.msra.mxu0 0
        %1018 = vmatprep.subr.bf16.mxu0 0
        %1019 = vmatpush1.bf16.xpose.msra.mxu0 0
        %1020 = vmatprep.subr.bf16.mxu0 0
        %1021 = vmatpush1.bf16.xpose.msra.mxu0 0
        %1022 = vmatprep.subr.bf16.mxu0 0
        %1023 = vmatpush1.bf16.xpose.msra.mxu0 0
        %1024 = vmatprep.subr.bf16.mxu0 0
        %1025 = vmatpush1.bf16.xpose.msra.mxu0 0
        %1026 = vmatprep.subr.bf16.mxu0 0
        %1027 = vmatpush1.bf16.xpose.msra.mxu0 0
        %1028 = vmatprep.subr.bf16.mxu0 0
        %1029 = vmatpush1.bf16.xpose.msra.mxu0 0
        %1030 = vmatprep.subr.bf16.mxu0 0
        %1031 = vmatpush1.bf16.xpose.msra.mxu0 0
        %1032 = vmatprep.subr.bf16.mxu0 0
        %1033 = vmatpush1.bf16.xpose.msra.mxu0 0
        %1034 = vmatprep.subr.bf16.mxu0 0
        %1035 = vmatpush1.bf16.xpose.msra.mxu0 0
        %1036 = vmatprep.subr.bf16.mxu0 0
        %1037 = vmatpush1.bf16.xpose.msra.mxu0 0
        %1038 = vmatprep.subr.bf16.mxu0 0
        %1039 = vmatpush1.bf16.xpose.msra.mxu0 0
        %1040 = vmatprep.mubr.bf16.mxu0 0
        %1041 = vmatmul.mubr.bf16.gmra.mrb[0].mxu0 %v1003
        %v1042 = vpop.f32.mrb[0].mxu0
        %v1043 = vadd.f32 0.0, %v1042
        %v1044 = vpop.f32.mrb[0].mxu0
        %v1045 = vpop.f32.mrb[0].mxu0
        %v1046 = vpop.f32.mrb[0].mxu0
        %1047 = vdwg.mxu0
        %v1048 = vsel %vm763, %v1043, -inf
        %1049 = vmax.xlane.f32.xlu0 %v1048
        %v1050 = vpop.xlane.xlu0 %1049
        %v1051 = vsub.f32 %v1043, %v1050
        %v1052 = vmul.f32 %v1051, 1.442695
        %v1053 = vpow.pop %v1052
        %v1054 = vsel %vm763, %v1053, 0.0
        %1055 = vadd.xlane.f32.xlu0 %v1054
        %v1056 = vpop.xlane.xlu0 %1055
        %v1057 = vrcp.pop %v1056
        %v1058 = vpack.c.bf16 %v1053, %v1053
        %1059 = vrot.lane.b32.xlu0 %v939, 112
        %v1060 = vpop.permute.xlu0 %1059
        %v1062 = vsel %vm763, %v1058, 0
        %v1065 = vsel %vm824, %v1060, 0
        %1067 = vmatprep.subr.bf16.mxu0 0
        %1068 = vmatpush1.bf16.msra.mxu0 %v1065
        %1069 = vmatprep.subr.bf16.mxu0 0
        %1070 = vmatpush1.bf16.msra.mxu0 0
        %1071 = vmatprep.subr.bf16.mxu0 0
        %1072 = vmatpush1.bf16.msra.mxu0 0
        %1073 = vmatprep.subr.bf16.mxu0 0
        %1074 = vmatpush1.bf16.msra.mxu0 0
        %1075 = vmatprep.subr.bf16.mxu0 0
        %1076 = vmatpush1.bf16.msra.mxu0 0
        %1077 = vmatprep.subr.bf16.mxu0 0
        %1078 = vmatpush1.bf16.msra.mxu0 0
        %1079 = vmatprep.subr.bf16.mxu0 0
        %1080 = vmatpush1.bf16.msra.mxu0 0
        %1081 = vmatprep.subr.bf16.mxu0 0
        %1082 = vmatpush1.bf16.msra.mxu0 0
        %1083 = vmatprep.subr.bf16.mxu0 0
        %1084 = vmatpush1.bf16.msra.mxu0 0
        %1085 = vmatprep.subr.bf16.mxu0 0
        %1086 = vmatpush1.bf16.msra.mxu0 0
        %1087 = vmatprep.subr.bf16.mxu0 0
        %1088 = vmatpush1.bf16.msra.mxu0 0
        %1089 = vmatprep.subr.bf16.mxu0 0
        %1090 = vmatpush1.bf16.msra.mxu0 0
        %1091 = vmatprep.subr.bf16.mxu0 0
        %1092 = vmatpush1.bf16.msra.mxu0 0
        %1093 = vmatprep.subr.bf16.mxu0 0
        %1094 = vmatpush1.bf16.msra.mxu0 0
        %1095 = vmatprep.subr.bf16.mxu0 0
        %1096 = vmatpush1.bf16.msra.mxu0 0
        %1097 = vmatprep.subr.bf16.mxu0 0
        %1098 = vmatpush1.bf16.msra.mxu0 0
        %1099 = vmatprep.mubr.bf16.mxu0 0
        %1100 = vmatmul.mubr.bf16.gmra.mrb[0].mxu0 %v1062
        %v1101 = vpop.f32.mrb[0].mxu0
        %v1102 = vadd.f32 0.0, %v1101
        %v1103 = vpop.f32.mrb[0].mxu0
        %v1104 = vpop.f32.mrb[0].mxu0
        %v1105 = vpop.f32.mrb[0].mxu0
        %1106 = vdwg.mxu0
        %v1107 = vmul.f32 %v1102, %v1057
        %v1108 = vpack.c.bf16 %v1107, %v1107
        %v1110 = vunpack.c.l.b16 %v1108
        %v1111 = vpack.c.b16 %v1110, %v1110
        %1112 = vrot.lane.b32.xlu0 %v1111, 16
        %v1113 = vpop.permute.xlu0 %1112
        %vm1115 = vcmask 191616
        %1116 = vst.msk [vmem:[#allocation4] sm:$0xf] %vm1115, %v1113
        %1117 = vrot.lane.b32.xlu0 %v760, 104
        %v1118 = vpop.permute.xlu0 %1117
        %1119 = vrot.lane.b32.xlu0 %v877, 104
        %v1120 = vpop.permute.xlu0 %1119
        %v1122 = vsel %vm763, %v1118, 0
        %v1125 = vsel %vm763, %v1120, 0
        %1127 = vmatprep.subr.bf16.mxu0 0
        %1128 = vmatpush1.bf16.xpose.msra.mxu0 %v1125
        %1129 = vmatprep.subr.bf16.mxu0 0
        %1130 = vmatpush1.bf16.xpose.msra.mxu0 0
        %1131 = vmatprep.subr.bf16.mxu0 0
        %1132 = vmatpush1.bf16.xpose.msra.mxu0 0
        %1133 = vmatprep.subr.bf16.mxu0 0
        %1134 = vmatpush1.bf16.xpose.msra.mxu0 0
        %1135 = vmatprep.subr.bf16.mxu0 0
        %1136 = vmatpush1.bf16.xpose.msra.mxu0 0
        %1137 = vmatprep.subr.bf16.mxu0 0
        %1138 = vmatpush1.bf16.xpose.msra.mxu0 0
        %1139 = vmatprep.subr.bf16.mxu0 0
        %1140 = vmatpush1.bf16.xpose.msra.mxu0 0
        %1141 = vmatprep.subr.bf16.mxu0 0
        %1142 = vmatpush1.bf16.xpose.msra.mxu0 0
        %1143 = vmatprep.subr.bf16.mxu0 0
        %1144 = vmatpush1.bf16.xpose.msra.mxu0 0
        %1145 = vmatprep.subr.bf16.mxu0 0
        %1146 = vmatpush1.bf16.xpose.msra.mxu0 0
        %1147 = vmatprep.subr.bf16.mxu0 0
        %1148 = vmatpush1.bf16.xpose.msra.mxu0 0
        %1149 = vmatprep.subr.bf16.mxu0 0
        %1150 = vmatpush1.bf16.xpose.msra.mxu0 0
        %1151 = vmatprep.subr.bf16.mxu0 0
        %1152 = vmatpush1.bf16.xpose.msra.mxu0 0
        %1153 = vmatprep.subr.bf16.mxu0 0
        %1154 = vmatpush1.bf16.xpose.msra.mxu0 0
        %1155 = vmatprep.subr.bf16.mxu0 0
        %1156 = vmatpush1.bf16.xpose.msra.mxu0 0
        %1157 = vmatprep.subr.bf16.mxu0 0
        %1158 = vmatpush1.bf16.xpose.msra.mxu0 0
        %1159 = vmatprep.mubr.bf16.mxu0 0
        %1160 = vmatmul.mubr.bf16.gmra.mrb[0].mxu0 %v1122
        %v1161 = vpop.f32.mrb[0].mxu0
        %v1162 = vadd.f32 0.0, %v1161
        %v1163 = vpop.f32.mrb[0].mxu0
        %v1164 = vpop.f32.mrb[0].mxu0
        %v1165 = vpop.f32.mrb[0].mxu0
        %1166 = vdwg.mxu0
        %v1167 = vsel %vm763, %v1162, -inf
        %1168 = vmax.xlane.f32.xlu0 %v1167
        %v1169 = vpop.xlane.xlu0 %1168
        %v1170 = vsub.f32 %v1162, %v1169
        %v1171 = vmul.f32 %v1170, 1.442695
        %v1172 = vpow.pop %v1171
        %v1173 = vsel %vm763, %v1172, 0.0
        %1174 = vadd.xlane.f32.xlu0 %v1173
        %v1175 = vpop.xlane.xlu0 %1174
        %v1176 = vrcp.pop %v1175
        %v1177 = vpack.c.bf16 %v1172, %v1172
        %1178 = vrot.lane.b32.xlu0 %v939, 104
        %v1179 = vpop.permute.xlu0 %1178
        %v1181 = vsel %vm763, %v1177, 0
        %v1184 = vsel %vm824, %v1179, 0
        %1186 = vmatprep.subr.bf16.mxu0 0
        %1187 = vmatpush1.bf16.msra.mxu0 %v1184
        %1188 = vmatprep.subr.bf16.mxu0 0
        %1189 = vmatpush1.bf16.msra.mxu0 0
        %1190 = vmatprep.subr.bf16.mxu0 0
        %1191 = vmatpush1.bf16.msra.mxu0 0
        %1192 = vmatprep.subr.bf16.mxu0 0
        %1193 = vmatpush1.bf16.msra.mxu0 0
        %1194 = vmatprep.subr.bf16.mxu0 0
        %1195 = vmatpush1.bf16.msra.mxu0 0
        %1196 = vmatprep.subr.bf16.mxu0 0
        %1197 = vmatpush1.bf16.msra.mxu0 0
        %1198 = vmatprep.subr.bf16.mxu0 0
        %1199 = vmatpush1.bf16.msra.mxu0 0
        %1200 = vmatprep.subr.bf16.mxu0 0
        %1201 = vmatpush1.bf16.msra.mxu0 0
        %1202 = vmatprep.subr.bf16.mxu0 0
        %1203 = vmatpush1.bf16.msra.mxu0 0
        %1204 = vmatprep.subr.bf16.mxu0 0
        %1205 = vmatpush1.bf16.msra.mxu0 0
        %1206 = vmatprep.subr.bf16.mxu0 0
        %1207 = vmatpush1.bf16.msra.mxu0 0
        %1208 = vmatprep.subr.bf16.mxu0 0
        %1209 = vmatpush1.bf16.msra.mxu0 0
        %1210 = vmatprep.subr.bf16.mxu0 0
        %1211 = vmatpush1.bf16.msra.mxu0 0
        %1212 = vmatprep.subr.bf16.mxu0 0
        %1213 = vmatpush1.bf16.msra.mxu0 0
        %1214 = vmatprep.subr.bf16.mxu0 0
        %1215 = vmatpush1.bf16.msra.mxu0 0
        %1216 = vmatprep.subr.bf16.mxu0 0
        %1217 = vmatpush1.bf16.msra.mxu0 0
        %1218 = vmatprep.mubr.bf16.mxu0 0
        %1219 = vmatmul.mubr.bf16.gmra.mrb[0].mxu0 %v1181
        %v1220 = vpop.f32.mrb[0].mxu0
        %v1221 = vadd.f32 0.0, %v1220
        %v1222 = vpop.f32.mrb[0].mxu0
        %v1223 = vpop.f32.mrb[0].mxu0
        %v1224 = vpop.f32.mrb[0].mxu0
        %1225 = vdwg.mxu0
        %v1226 = vmul.f32 %v1221, %v1176
        %v1227 = vpack.c.bf16 %v1226, %v1226
        %v1229 = vunpack.c.l.b16 %v1227
        %v1230 = vpack.c.b16 %v1229, %v1229
        %1231 = vrot.lane.b32.xlu0 %v1230, 24
        %v1232 = vpop.permute.xlu0 %1231
        %vm1234 = vcmask 257216
        %1235 = vst.msk [vmem:[#allocation4] sm:$0xf] %vm1234, %v1232
        %v1236 = vld [vmem:[#allocation4] sm:$0xf]
        %v1237 = vld [vmem:[#allocation14] sm:$0xf]
        %v1238 = vld [vmem:[#allocation14 + $0x4] sm:$0xf]
        %v1239 = vld [vmem:[#allocation14 + $0x8] sm:$0xf]
        %v1240 = vld [vmem:[#allocation14 + $0xc] sm:$0xf]
        %v1241 = vld [vmem:[#allocation16] sm:$0x1]
        %v1243 = vlaneseq
        %v1244 = vshrl.u32 %v1243, 7
        %v1245 = vsub.s32 0, %v1244
        %v1246 = vrot.slane %v1241, %v1245
        %v1252 = vunpack.c.l.b16 %v1237
        %v1253 = vunpack.c.l.b16 %v1238
        %v1254 = vunpack.c.l.b16 %v1239
        %v1255 = vunpack.c.l.b16 %v1240
        %v1256 = vpack.c.b16 %v1253, %v1252
        %v1257 = vpack.c.b16 %v1255, %v1254
        %v1261 = vsel %vm716, %v1236, 0
        %1263 = vmatprep.subr.bf16.mxu0 0
        %1264 = vmatpush1.bf16.msra.mxu0 %v1256
        %1265 = vmatprep.subr.bf16.mxu0 0
        %1266 = vmatpush1.bf16.msra.mxu0 %v1257
        %1267 = vmatprep.subr.bf16.mxu0 0
        %1268 = vmatpush1.bf16.msra.mxu0 0
        %1269 = vmatprep.subr.bf16.mxu0 0
        %1270 = vmatpush1.bf16.msra.mxu0 0
        %1271 = vmatprep.subr.bf16.mxu0 0
        %1272 = vmatpush1.bf16.msra.mxu0 0
        %1273 = vmatprep.subr.bf16.mxu0 0
        %1274 = vmatpush1.bf16.msra.mxu0 0
        %1275 = vmatprep.subr.bf16.mxu0 0
        %1276 = vmatpush1.bf16.msra.mxu0 0
        %1277 = vmatprep.subr.bf16.mxu0 0
        %1278 = vmatpush1.bf16.msra.mxu0 0
        %1279 = vmatprep.subr.bf16.mxu0 0
        %1280 = vmatpush1.bf16.msra.mxu0 0
        %1281 = vmatprep.subr.bf16.mxu0 0
        %1282 = vmatpush1.bf16.msra.mxu0 0
        %1283 = vmatprep.subr.bf16.mxu0 0
        %1284 = vmatpush1.bf16.msra.mxu0 0
        %1285 = vmatprep.subr.bf16.mxu0 0
        %1286 = vmatpush1.bf16.msra.mxu0 0
        %1287 = vmatprep.subr.bf16.mxu0 0
        %1288 = vmatpush1.bf16.msra.mxu0 0
        %1289 = vmatprep.subr.bf16.mxu0 0
        %1290 = vmatpush1.bf16.msra.mxu0 0
        %1291 = vmatprep.subr.bf16.mxu0 0
        %1292 = vmatpush1.bf16.msra.mxu0 0
        %1293 = vmatprep.subr.bf16.mxu0 0
        %1294 = vmatpush1.bf16.msra.mxu0 0
        %1295 = vmatprep.mubr.bf16.mxu0 0
        %1296 = vmatmul.mubr.bf16.gmra.mrb[0].mxu0 %v1261
        %v1297 = vpop.f32.mrb[0].mxu0
        %v1298 = vadd.f32 %v1246, %v1297
        %v1299 = vpop.f32.mrb[0].mxu0
        %v1300 = vpop.f32.mrb[0].mxu0
        %v1301 = vpop.f32.mrb[0].mxu0
        %1302 = vdwg.mxu0
        %1303 = vst.msk [vmem:[%s543] sm:$0xff] %vm716, %v1298
        %s1304 = sand.u32 %s303, 1
        %s1305 = scalar_lea.sflag [#allocation7], %s1304
        %s1306 = sand.u32 %s303, 1
        %s1307 = smul.addr %s1306, 8
        %s1308 = scalar_lea.vmem [#allocation17], %s1307
        // Predicated region
        $region97: #{attention_layer.1} parent=63 // pred_check
          %p1309 = pneg %p313
        $region98: #{attention_layer.1} parent=63 // pred_check_branch
          %1311 = sbr.rel (%p1309) target = $region100
        $region99: #{attention_layer.1} parent=63 // pred_region
          %s1313 = ssub.s32 128, 128
          %1314 = vsyncadd %s1305, %s1313
          %s1315 = sadd.s32 %s38, %s37
          %s1316 = smul.addr %s1315, 128
          %s1317 = scalar_lea.hbm %s11, %s1316
          %s1319 = sshll.u32 %s1308, 4
          %s1320 = int_to_ptr.vmem [resolvable:$true] %s1319
          %1322 = dma.vmem_to_hbm [thread:$0]  %s1320, 128, %s1317, %s1305
        $region100: #{attention_layer.1} parent=63 // pred_fallthru
          _
      $region64: #{attention_layer.1} parent=5 // pred_fallthru
        _
      %p1323 = scmp.le.s32.totalorder 2, %s28
      // Predicated region
      $region101: #{attention_layer.1} parent=5 // pred_check
        %p1324 = pneg %p1323
      $region102: #{attention_layer.1} parent=5 // pred_check_branch
        %1326 = sbr.rel (%p1324) target = $region104
      $region103: #{attention_layer.1} parent=5 // pred_region
        %s1327 = ssub.s32 %s28, 2
        // Predicated region
        $region105: #{attention_layer.1} parent=103 // pred_check
          %p1328 = pneg %p319
        $region106: #{attention_layer.1} parent=103 // pred_check_branch
          %1330 = sbr.rel (%p1328) target = $region108
        $region107: #{attention_layer.1} parent=103 // pred_region
          %s1331 = sand.u32 %s304, 1
          %s1332 = scalar_lea.sflag [#allocation7], %s1331
          %s1333 = sand.u32 %s304, 1
          %s1334 = smul.addr %s1333, 8
          %s1335 = scalar_lea.vmem [#allocation17], %s1334
          %1336 = dma.done %s1332, 128
        $region108: #{attention_layer.1} parent=103 // pred_fallthru
          _
      $region104: #{attention_layer.1} parent=5 // pred_fallthru
        _
    $region6: #{attention_layer.1} parent=1 // loop_footer
      %s32 = sadd.s32 1, %s28
    $region7: #{attention_layer.1} parent=1 // loop_footer_branch
      %27 = sbr.rel target = $region3
    $region8: #{attention_layer.1} parent=1 // loop_exit
      _
    %1337 = vsyncpa [#allocation6], 1
    %s1338 = scalar_lea.sflag [#allocation6], 1
    %1339 = vsyncpa %s1338, 1
    %1340 = vsyncpa [#allocation9], 1
    %s1341 = scalar_lea.sflag [#allocation9], 1
    %1342 = vsyncpa %s1341, 1
    %1343 = vsyncpa [#allocation12], 1
    %1344 = vsyncpa [#allocation15], 1
    %1345 = vsyncpa [#allocation7], 1
    %s1346 = scalar_lea.sflag [#allocation7], 1
    %1347 = vsyncpa %s1346, 1

</llo_original>
